<compile_context>
chip_gen: v6e
topology: v6e:2x2x1
jax: 0.10.0
libtpu: 0.0.40
codegen_flags: <defaults>
</compile_context>

<pallas_src>
import functools

import jax
import jax.numpy as jnp
from jax.experimental import pallas as pl
from jax.experimental.pallas import tpu as pltpu


def _round_up(x: int, m: int) -> int:
    return ((x + m - 1) // m) * m


def _default_num_steps() -> int:
    """One grid step per TensorCore: 1 on single-TC chips, 2 on dual-TC chips."""
    try:
        kind = jax.devices()[0].device_kind.lower()
    except Exception:
        return 1
    return 2 if any(tag in kind for tag in ("v7", "v4", "v5p")) else 1


def _pick_batch_tiling(batch: int, num_steps: int, max_tile_b: int):
    tb = _round_up(pl.cdiv(batch, num_steps), 8)
    tb = min(tb, max_tile_b)          # keep per-step VMEM footprint trivial
    b_padded = _round_up(batch, tb)
    return tb, b_padded


def _mlp_kernel(x_ref, w1_ref, b1_ref, w2_ref, b2_ref, o_ref):
    # ---- Layer 1: x @ W1 + b1, sigmoid (MXU dot, f32 accumulate) ----
    x = x_ref[...].astype(w1_ref.dtype)
    h = jnp.dot(x, w1_ref[...], preferred_element_type=jnp.float32)
    h = jax.nn.sigmoid(h + b1_ref[...])          # (TB, Hp) + (1, Hp), f32

    # ---- Layer 2: h @ W2 + b2 ----
    # Padded hidden lanes hold sigmoid(0)=0.5 but the matching W2 rows are
    # zero (inert).  Padded output lanes have zero W2 columns and b2=-1e30,
    # so their logits are exactly -1e30 and vanish from the softmax.
    logits = jnp.dot(h.astype(w2_ref.dtype), w2_ref[...],
                     preferred_element_type=jnp.float32)
    logits = logits + b2_ref[...]                # (TB, Op) + (1, Op), f32

    # ---- Numerically stable softmax over dim=1 (last axis) ----
    m = jnp.max(logits, axis=-1, keepdims=True)
    e = jnp.exp(logits - m)
    denom = jnp.sum(e, axis=-1, keepdims=True)
    r = pl.reciprocal(denom, approx=True)        # EUP vrcp (free slot)
    r = r * (2.0 - denom * r)                    # one Newton step -> ~f32 accuracy
    out = e * r

    # Narrow store: only the real output lanes (masked vst; tiny amount of data).
    o_ref[...] = out[:, : o_ref.shape[-1]].astype(o_ref.dtype)


def prepare_params(w1, b1, w2, b2, *, compute_dtype=jnp.bfloat16):
    """One-time pad + cast of the parameters (hoist this out of the hot loop).

    w1: (D_in, H), b1: (H,), w2: (H, O), b2: (O,) -- all float32.
    Returns (w1_p, b1_p, w2_p, b2_p, out_dim) with feature dims padded to
    multiples of 128; weights cast to `compute_dtype`, biases kept f32.
    """
    d_in, h_dim = w1.shape
    o_dim = w2.shape[1]
    h_pad = _round_up(h_dim, 128)
    o_pad = _round_up(o_dim, 128)

    w1_p = jnp.pad(w1, ((0, 0), (0, h_pad - h_dim))).astype(compute_dtype)
    b1_p = jnp.pad(jnp.reshape(b1, (1, h_dim)),
                   ((0, 0), (0, h_pad - h_dim))).astype(jnp.float32)
    # Zero rows for padded hidden lanes, zero cols for padded output lanes.
    w2_p = jnp.pad(w2, ((0, h_pad - h_dim), (0, o_pad - o_dim))).astype(compute_dtype)
    # Bake the output-lane softmax mask into the bias row.
    b2_p = jnp.pad(jnp.reshape(b2, (1, o_dim)).astype(jnp.float32),
                   ((0, 0), (0, o_pad - o_dim)), constant_values=-1e30)
    return w1_p, b1_p, w2_p, b2_p, o_dim


def mlp_forward_padded(x, w1_p, b1_p, w2_p, b2_p, *, out_dim,
                       num_steps=None, max_tile_b=4096):
    """Hot path: fused softmax(sigmoid(x @ W1 + b1) @ W2 + b2, axis=1).

    Expects parameters already padded/cast via prepare_params().
    Returns (B, out_dim) float32.
    """
    batch, d_in = x.shape
    assert w1_p.shape[0] == d_in, "x feature dim must match W1 rows"
    h_pad = w1_p.shape[1]
    o_pad = w2_p.shape[1]

    if num_steps is None:
        num_steps = _default_num_steps()
    tb, b_padded = _pick_batch_tiling(batch, num_steps, max_tile_b)

    x_p = x if b_padded == batch else jnp.pad(x, ((0, b_padded - batch), (0, 0)))

    out_padded = pl.pallas_call(
        _mlp_kernel,
        out_shape=jax.ShapeDtypeStruct((b_padded, out_dim), jnp.float32),
        grid=(b_padded // tb,),
        in_specs=[
            pl.BlockSpec((tb, d_in), lambda i: (i, 0)),      # x: streamed over batch
            pl.BlockSpec((d_in, h_pad), lambda i: (0, 0)),   # W1: resident
            pl.BlockSpec((1, h_pad), lambda i: (0, 0)),      # b1: resident
            pl.BlockSpec((h_pad, o_pad), lambda i: (0, 0)),  # W2: resident
            pl.BlockSpec((1, o_pad), lambda i: (0, 0)),      # b2: resident (mask baked in)
        ],
        out_specs=pl.BlockSpec((tb, out_dim), lambda i: (i, 0)),
        compiler_params=pltpu.CompilerParams(
            dimension_semantics=("parallel",),
        ),
    )(x_p, w1_p, b1_p, w2_p, b2_p)

    return out_padded if b_padded == batch else out_padded[:batch]


def mlp_forward(x, w1, b1, w2, b2, *, compute_dtype=jnp.bfloat16, num_steps=None):
    """Convenience one-shot wrapper (prep + kernel).  Prefer prepare_params()
    + mlp_forward_padded() when the parameters are reused across calls."""
    w1_p, b1_p, w2_p, b2_p, o_dim = prepare_params(
        w1, b1, w2, b2, compute_dtype=compute_dtype)
    return mlp_forward_padded(x, w1_p, b1_p, w2_p, b2_p,
                              out_dim=o_dim, num_steps=num_steps)


def _reference_f32(x, w1, b1, w2, b2):
    h = jax.nn.sigmoid(x @ w1 + b1[None, :])
    return jax.nn.softmax(h @ w2 + b2[None, :], axis=1)


def _reference_matched(x, w1, b1, w2, b2, compute_dtype):
    """Same math as the kernel's precision policy (bf16 MXU inputs, f32 acc)."""
    h = jnp.dot(x.astype(compute_dtype), w1.astype(compute_dtype),
                preferred_element_type=jnp.float32) + b1[None, :]
    h = jax.nn.sigmoid(h)
    logits = jnp.dot(h.astype(compute_dtype), w2.astype(compute_dtype),
                     preferred_element_type=jnp.float32) + b2[None, :]
    return jax.nn.softmax(logits, axis=1)


if __name__ == "__main__":
    # Small shapes consistent with the module's forward.
    batch, input_size, hidden_size, output_size = 512, 32, 64, 16

    key = jax.random.PRNGKey(0)
    kx, kw1, kb1, kw2, kb2 = jax.random.split(key, 5)

    x = jax.random.normal(kx, (batch, input_size), dtype=jnp.float32)

    # Deterministic parameter init (PyTorch Linear default-ish uniform scale).
    lim1 = 1.0 / (input_size ** 0.5)
    lim2 = 1.0 / (hidden_size ** 0.5)
    w1 = jax.random.uniform(kw1, (input_size, hidden_size), jnp.float32, -lim1, lim1)
    b1 = jax.random.uniform(kb1, (hidden_size,), jnp.float32, -lim1, lim1)
    w2 = jax.random.uniform(kw2, (hidden_size, output_size), jnp.float32, -lim2, lim2)
    b2 = jax.random.uniform(kb2, (output_size,), jnp.float32, -lim2, lim2)

    ref_f32 = _reference_f32(x, w1, b1, w2, b2)

    # --- Primary (recommended) path: params prepared once, bf16 MXU inputs ---
    w1_p, b1_p, w2_p, b2_p, out_dim = prepare_params(w1, b1, w2, b2)
    fwd_hot = jax.jit(functools.partial(mlp_forward_padded, out_dim=out_dim))
    out_bf16 = jax.block_until_ready(fwd_hot(x, w1_p, b1_p, w2_p, b2_p))
    assert out_bf16.shape == (batch, output_size)
    ref_matched = _reference_matched(x, w1, b1, w2, b2, jnp.bfloat16)
    assert jnp.allclose(out_bf16, ref_matched, atol=1e-4, rtol=1e-4)
    assert jnp.allclose(out_bf16, ref_f32, atol=3e-2)            # bf16 vs f32 drift
    assert jnp.allclose(jnp.sum(out_bf16, axis=1), 1.0, atol=1e-5)

    # --- Exact-f32 semantics path (matches the PyTorch module's precision) ---
    fwd = jax.jit(mlp_forward, static_argnames=("compute_dtype", "num_steps"))
    out_f32 = jax.block_until_ready(
        fwd(x, w1, b1, w2, b2, compute_dtype=jnp.float32))
    assert jnp.allclose(out_f32, ref_f32, atol=1e-4, rtol=1e-4)
    assert jnp.allclose(jnp.sum(out_f32, axis=1), 1.0, atol=1e-5)

    # --- Ragged small batch exercises the batch-padding + slice path ---
    x_small = x[:12]
    out_small = jax.block_until_ready(
        fwd(x_small, w1, b1, w2, b2, compute_dtype=jnp.float32))
    assert out_small.shape == (12, output_size)
    assert jnp.allclose(out_small, _reference_f32(x_small, w1, b1, w2, b2),
                        atol=1e-4, rtol=1e-4)

    print("KERNEL_OK")
</pallas_src>

<mosaic_0001>
module attributes {stable_mosaic.version = 11 : i64} {
  func.func @_mlp_kernel(%arg0: i32, %arg1: memref<512x32xf32, #tpu.memory_space<vmem>>, %arg2: memref<32x128xbf16, #tpu.memory_space<vmem>>, %arg3: memref<1x128xf32, #tpu.memory_space<vmem>>, %arg4: memref<128x128xbf16, #tpu.memory_space<vmem>>, %arg5: memref<1x128xf32, #tpu.memory_space<vmem>>, %arg6: memref<512x16xf32, #tpu.memory_space<vmem>>) attributes {dimension_semantics = [#tpu.dimension_semantics<parallel>], iteration_bounds = array<i64: 1>, scalar_prefetch = 0 : i64, scratch_operands = 0 : i64, tpu.core_type = #tpu.core_type<tc>, window_params = [{transform_indices = @transform_0, window_bounds = array<i64: 512, 32>}, {pipeline_mode = #tpu.pipeline_mode<synchronous>, transform_indices = @transform_1, window_bounds = array<i64: 32, 128>}, {pipeline_mode = #tpu.pipeline_mode<synchronous>, transform_indices = @transform_2, window_bounds = array<i64: 1, 128>}, {pipeline_mode = #tpu.pipeline_mode<synchronous>, transform_indices = @transform_3, window_bounds = array<i64: 128, 128>}, {pipeline_mode = #tpu.pipeline_mode<synchronous>, transform_indices = @transform_4, window_bounds = array<i64: 1, 128>}, {transform_indices = @transform_5, window_bounds = array<i64: 512, 16>}]} {
    %c0 = arith.constant 0 : index
    %c0_0 = arith.constant 0 : index
    %0 = vector.load %arg1[%c0, %c0_0] : memref<512x32xf32, #tpu.memory_space<vmem>>, vector<512x32xf32>
    %1 = arith.truncf %0 : vector<512x32xf32> to vector<512x32xbf16>
    %c0_1 = arith.constant 0 : index
    %c0_2 = arith.constant 0 : index
    %2 = vector.load %arg2[%c0_1, %c0_2] : memref<32x128xbf16, #tpu.memory_space<vmem>>, vector<32x128xbf16>
    %cst = arith.constant dense<0.000000e+00> : vector<512x128xf32>
    %3 = tpu.matmul %1, %2, %cst {dimension_numbers = #tpu.dot_dimension_numbers<[1], [0], [0], [1], [0, 0, 1, 1], [], []>} : vector<512x32xbf16>, vector<32x128xbf16>, vector<512x128xf32> -> vector<512x128xf32>
    %c0_3 = arith.constant 0 : index
    %c0_4 = arith.constant 0 : index
    %4 = vector.load %arg3[%c0_3, %c0_4] : memref<1x128xf32, #tpu.memory_space<vmem>>, vector<1x128xf32>
    %5 = vector.broadcast %4 : vector<1x128xf32> to vector<512x128xf32>
    %6 = arith.addf %3, %5 : vector<512x128xf32>
    %7 = arith.negf %6 : vector<512x128xf32>
    %8 = math.exp %7 : vector<512x128xf32>
    %cst_5 = arith.constant 1.000000e+00 : f32
    %9 = vector.broadcast %cst_5 : f32 to vector<512x128xf32>
    %10 = arith.addf %9, %8 : vector<512x128xf32>
    %11 = arith.divf %9, %10 : vector<512x128xf32>
    %12 = arith.truncf %11 : vector<512x128xf32> to vector<512x128xbf16>
    %c0_6 = arith.constant 0 : index
    %c0_7 = arith.constant 0 : index
    %13 = vector.load %arg4[%c0_6, %c0_7] : memref<128x128xbf16, #tpu.memory_space<vmem>>, vector<128x128xbf16>
    %cst_8 = arith.constant dense<0.000000e+00> : vector<512x128xf32>
    %14 = tpu.matmul %12, %13, %cst_8 {dimension_numbers = #tpu.dot_dimension_numbers<[1], [0], [0], [1], [0, 0, 1, 1], [], []>} : vector<512x128xbf16>, vector<128x128xbf16>, vector<512x128xf32> -> vector<512x128xf32>
    %c0_9 = arith.constant 0 : index
    %c0_10 = arith.constant 0 : index
    %15 = vector.load %arg5[%c0_9, %c0_10] : memref<1x128xf32, #tpu.memory_space<vmem>>, vector<1x128xf32>
    %16 = vector.broadcast %15 : vector<1x128xf32> to vector<512x128xf32>
    %17 = arith.addf %14, %16 : vector<512x128xf32>
    %cst_11 = arith.constant dense<0xFF800000> : vector<512xf32>
    %18 = vector.multi_reduction <maximumf>, %17, %cst_11 [1] : vector<512x128xf32> to vector<512xf32>
    %19 = vector.shape_cast %18 : vector<512xf32> to vector<512x1xf32>
    %20 = vector.broadcast %19 : vector<512x1xf32> to vector<512x128xf32>
    %21 = arith.subf %17, %20 : vector<512x128xf32>
    %22 = math.exp %21 : vector<512x128xf32>
    %cst_12 = arith.constant dense<0.000000e+00> : vector<512xf32>
    %23 = vector.multi_reduction <add>, %22, %cst_12 [1] : vector<512x128xf32> to vector<512xf32>
    %24 = vector.shape_cast %23 : vector<512xf32> to vector<512x1xf32>
    %25 = tpu.reciprocal %24 {approx = true} : vector<512x1xf32> -> vector<512x1xf32>
    %26 = arith.mulf %24, %25 : vector<512x1xf32>
    %cst_13 = arith.constant 2.000000e+00 : f32
    %27 = vector.broadcast %cst_13 : f32 to vector<512x1xf32>
    %28 = arith.subf %27, %26 : vector<512x1xf32>
    %29 = arith.mulf %25, %28 : vector<512x1xf32>
    %30 = vector.broadcast %29 : vector<512x1xf32> to vector<512x128xf32>
    %31 = arith.mulf %22, %30 : vector<512x128xf32>
    %32 = vector.extract_strided_slice %31 {offsets = [0, 0], sizes = [512, 16], strides = [1, 1]} : vector<512x128xf32> to vector<512x16xf32>
    %c0_14 = arith.constant 0 : index
    %c0_15 = arith.constant 0 : index
    %33 = vector.load %arg6[%c0_14, %c0_15] : memref<512x16xf32, #tpu.memory_space<vmem>>, vector<512x16xf32>
    tpu.vector_store %arg6[%c0_14, %c0_15], %32 {strides = array<i32>} : memref<512x16xf32, #tpu.memory_space<vmem>>, vector<512x16xf32>,
    return
  }
  func.func @transform_0(%arg0: i32) -> (i32, i32) {
    %c0_i32 = arith.constant 0 : i32
    %c0_i32_0 = arith.constant 0 : i32
    return %arg0, %c0_i32 : i32, i32
  }
  func.func @transform_1(%arg0: i32) -> (i32, i32) {
    %c0_i32 = arith.constant 0 : i32
    %c0_i32_0 = arith.constant 0 : i32
    %c0_i32_1 = arith.constant 0 : i32
    return %c0_i32, %c0_i32_0 : i32, i32
  }
  func.func @transform_2(%arg0: i32) -> (i32, i32) {
    %c0_i32 = arith.constant 0 : i32
    %c0_i32_0 = arith.constant 0 : i32
    %c0_i32_1 = arith.constant 0 : i32
    return %c0_i32, %c0_i32_0 : i32, i32
  }
  func.func @transform_3(%arg0: i32) -> (i32, i32) {
    %c0_i32 = arith.constant 0 : i32
    %c0_i32_0 = arith.constant 0 : i32
    %c0_i32_1 = arith.constant 0 : i32
    return %c0_i32, %c0_i32_0 : i32, i32
  }
  func.func @transform_4(%arg0: i32) -> (i32, i32) {
    %c0_i32 = arith.constant 0 : i32
    %c0_i32_0 = arith.constant 0 : i32
    %c0_i32_1 = arith.constant 0 : i32
    return %c0_i32, %c0_i32_0 : i32, i32
  }
  func.func @transform_5(%arg0: i32) -> (i32, i32) {
    %c0_i32 = arith.constant 0 : i32
    %c0_i32_0 = arith.constant 0 : i32
    return %arg0, %c0_i32 : i32, i32
  }
}

</mosaic_0001>

<llo_original>
// kernel: mlp_forward_padded.1
$region0: #{mlp_forward_padded.1}
  #allocation0 [shape = 'u32[]', space=smem, size = 0x4, offset = 0x4, fixed_abs, tag = 'smem constant byte address 0x4 - core index']
  #allocation1 [shape = 'u32[144,128]{1,0:T(1,128)}', space=vmem, size = 0x12000, scoped, tag = 'internal scratch']
  %s0 = inlined_call_operand.vmem [shape: f32[512,32], index: 0, kind: input, shape index: {}]
  %s1 = inlined_call_operand.vmem [shape: bf16[32,128], index: 1, kind: input, shape index: {}]
  %s2 = inlined_call_operand.vmem [shape: f32[1,128], index: 2, kind: input, shape index: {}]
  %s3 = inlined_call_operand.vmem [shape: bf16[128,128], index: 3, kind: input, shape index: {}]
  %s4 = inlined_call_operand.vmem [shape: f32[1,128], index: 4, kind: input, shape index: {}]
  %s5 = inlined_call_operand.vmem [shape: f32[512,16], index: 5, kind: output, shape index: {}]
  %s6 = sld [smem:[#allocation0]]
  $region30: #{mlp_forward_padded.1} parent=0
    _
  %s8 = ssub.s32 1, %s6
  %s9 = scalar_select 0, %s8, %s6
  // Predicated region
  $region2: #{mlp_forward_padded.1} parent=0 // pred_check
    _
  $region3: #{mlp_forward_padded.1} parent=0 // pred_check_branch
    %11 = sbr.rel (0) target = $region5
  $region4: #{mlp_forward_padded.1} parent=0 // pred_region
    _
  $region5: #{mlp_forward_padded.1} parent=0 // pred_fallthru
    _
  // Predicated region
  $region6: #{mlp_forward_padded.1} parent=0 // pred_check
    _
  $region7: #{mlp_forward_padded.1} parent=0 // pred_check_branch
    %13 = sbr.rel (0) target = $region9
  $region8: #{mlp_forward_padded.1} parent=0 // pred_region
    _
  $region9: #{mlp_forward_padded.1} parent=0 // pred_fallthru
    _
  // Predicated region
  $region10: #{mlp_forward_padded.1} parent=0 // pred_check
    _
  $region11: #{mlp_forward_padded.1} parent=0 // pred_check_branch
    %15 = sbr.rel (0) target = $region13
  $region12: #{mlp_forward_padded.1} parent=0 // pred_region
    _
  $region13: #{mlp_forward_padded.1} parent=0 // pred_fallthru
    _
  // Predicated region
  $region14: #{mlp_forward_padded.1} parent=0 // pred_check
    _
  $region15: #{mlp_forward_padded.1} parent=0 // pred_check_branch
    %17 = sbr.rel (0) target = $region17
  $region16: #{mlp_forward_padded.1} parent=0 // pred_region
    _
  $region17: #{mlp_forward_padded.1} parent=0 // pred_fallthru
    _
  // Predicated region
  $region18: #{mlp_forward_padded.1} parent=0 // pred_check
    _
  $region19: #{mlp_forward_padded.1} parent=0 // pred_check_branch
    %19 = sbr.rel (0) target = $region21
  $region20: #{mlp_forward_padded.1} parent=0 // pred_region
    _
  $region21: #{mlp_forward_padded.1} parent=0 // pred_fallthru
    _
  %v21 = vld [vmem:[%s0] sm:$0xff]
  %v22 = vld [vmem:[%s0 + $0x8] sm:$0xff]
  %v23 = vld [vmem:[%s0 + $0x10] sm:$0xff]
  %v24 = vld [vmem:[%s0 + $0x18] sm:$0xff]
  %v25 = vld [vmem:[%s0 + $0x20] sm:$0xff]
  %v26 = vld [vmem:[%s0 + $0x28] sm:$0xff]
  %v27 = vld [vmem:[%s0 + $0x30] sm:$0xff]
  %v28 = vld [vmem:[%s0 + $0x38] sm:$0xff]
  %v29 = vld [vmem:[%s0 + $0x40] sm:$0xff]
  %v30 = vld [vmem:[%s0 + $0x48] sm:$0xff]
  %v31 = vld [vmem:[%s0 + $0x50] sm:$0xff]
  %v32 = vld [vmem:[%s0 + $0x58] sm:$0xff]
  %v33 = vld [vmem:[%s0 + $0x60] sm:$0xff]
  %v34 = vld [vmem:[%s0 + $0x68] sm:$0xff]
  %v35 = vld [vmem:[%s0 + $0x70] sm:$0xff]
  %v36 = vld [vmem:[%s0 + $0x78] sm:$0xff]
  %v37 = vld [vmem:[%s0 + $0x80] sm:$0xff]
  %v38 = vld [vmem:[%s0 + $0x88] sm:$0xff]
  %v39 = vld [vmem:[%s0 + $0x90] sm:$0xff]
  %v40 = vld [vmem:[%s0 + $0x98] sm:$0xff]
  %v41 = vld [vmem:[%s0 + $0xa0] sm:$0xff]
  %v42 = vld [vmem:[%s0 + $0xa8] sm:$0xff]
  %v43 = vld [vmem:[%s0 + $0xb0] sm:$0xff]
  %v44 = vld [vmem:[%s0 + $0xb8] sm:$0xff]
  %v45 = vld [vmem:[%s0 + $0xc0] sm:$0xff]
  %v46 = vld [vmem:[%s0 + $0xc8] sm:$0xff]
  %v47 = vld [vmem:[%s0 + $0xd0] sm:$0xff]
  %v48 = vld [vmem:[%s0 + $0xd8] sm:$0xff]
  %v49 = vld [vmem:[%s0 + $0xe0] sm:$0xff]
  %v50 = vld [vmem:[%s0 + $0xe8] sm:$0xff]
  %v51 = vld [vmem:[%s0 + $0xf0] sm:$0xff]
  %v52 = vld [vmem:[%s0 + $0xf8] sm:$0xff]
  %v53 = vld [vmem:[%s0 + $0x100] sm:$0xff]
  %v54 = vld [vmem:[%s0 + $0x108] sm:$0xff]
  %v55 = vld [vmem:[%s0 + $0x110] sm:$0xff]
  %v56 = vld [vmem:[%s0 + $0x118] sm:$0xff]
  %v57 = vld [vmem:[%s0 + $0x120] sm:$0xff]
  %v58 = vld [vmem:[%s0 + $0x128] sm:$0xff]
  %v59 = vld [vmem:[%s0 + $0x130] sm:$0xff]
  %v60 = vld [vmem:[%s0 + $0x138] sm:$0xff]
  %v61 = vld [vmem:[%s0 + $0x140] sm:$0xff]
  %v62 = vld [vmem:[%s0 + $0x148] sm:$0xff]
  %v63 = vld [vmem:[%s0 + $0x150] sm:$0xff]
  %v64 = vld [vmem:[%s0 + $0x158] sm:$0xff]
  %v65 = vld [vmem:[%s0 + $0x160] sm:$0xff]
  %v66 = vld [vmem:[%s0 + $0x168] sm:$0xff]
  %v67 = vld [vmem:[%s0 + $0x170] sm:$0xff]
  %v68 = vld [vmem:[%s0 + $0x178] sm:$0xff]
  %v69 = vld [vmem:[%s0 + $0x180] sm:$0xff]
  %v70 = vld [vmem:[%s0 + $0x188] sm:$0xff]
  %v71 = vld [vmem:[%s0 + $0x190] sm:$0xff]
  %v72 = vld [vmem:[%s0 + $0x198] sm:$0xff]
  %v73 = vld [vmem:[%s0 + $0x1a0] sm:$0xff]
  %v74 = vld [vmem:[%s0 + $0x1a8] sm:$0xff]
  %v75 = vld [vmem:[%s0 + $0x1b0] sm:$0xff]
  %v76 = vld [vmem:[%s0 + $0x1b8] sm:$0xff]
  %v77 = vld [vmem:[%s0 + $0x1c0] sm:$0xff]
  %v78 = vld [vmem:[%s0 + $0x1c8] sm:$0xff]
  %v79 = vld [vmem:[%s0 + $0x1d0] sm:$0xff]
  %v80 = vld [vmem:[%s0 + $0x1d8] sm:$0xff]
  %v81 = vld [vmem:[%s0 + $0x1e0] sm:$0xff]
  %v82 = vld [vmem:[%s0 + $0x1e8] sm:$0xff]
  %v83 = vld [vmem:[%s0 + $0x1f0] sm:$0xff]
  %v84 = vld [vmem:[%s0 + $0x1f8] sm:$0xff]
  %v85 = vpack.c.bf16 %v22, %v21
  %v86 = vpack.c.bf16 %v24, %v23
  %v87 = vpack.c.bf16 %v26, %v25
  %v88 = vpack.c.bf16 %v28, %v27
  %v89 = vpack.c.bf16 %v30, %v29
  %v90 = vpack.c.bf16 %v32, %v31
  %v91 = vpack.c.bf16 %v34, %v33
  %v92 = vpack.c.bf16 %v36, %v35
  %v93 = vpack.c.bf16 %v38, %v37
  %v94 = vpack.c.bf16 %v40, %v39
  %v95 = vpack.c.bf16 %v42, %v41
  %v96 = vpack.c.bf16 %v44, %v43
  %v97 = vpack.c.bf16 %v46, %v45
  %v98 = vpack.c.bf16 %v48, %v47
  %v99 = vpack.c.bf16 %v50, %v49
  %v100 = vpack.c.bf16 %v52, %v51
  %v101 = vpack.c.bf16 %v54, %v53
  %v102 = vpack.c.bf16 %v56, %v55
  %v103 = vpack.c.bf16 %v58, %v57
  %v104 = vpack.c.bf16 %v60, %v59
  %v105 = vpack.c.bf16 %v62, %v61
  %v106 = vpack.c.bf16 %v64, %v63
  %v107 = vpack.c.bf16 %v66, %v65
  %v108 = vpack.c.bf16 %v68, %v67
  %v109 = vpack.c.bf16 %v70, %v69
  %v110 = vpack.c.bf16 %v72, %v71
  %v111 = vpack.c.bf16 %v74, %v73
  %v112 = vpack.c.bf16 %v76, %v75
  %v113 = vpack.c.bf16 %v78, %v77
  %v114 = vpack.c.bf16 %v80, %v79
  %v115 = vpack.c.bf16 %v82, %v81
  %v116 = vpack.c.bf16 %v84, %v83
  %v117 = vld [vmem:[%s1] sm:$0xf]
  %v118 = vld [vmem:[%s1 + $0x4] sm:$0xf]
  %v119 = vld [vmem:[%s1 + $0x8] sm:$0xf]
  %v120 = vld [vmem:[%s1 + $0xc] sm:$0xf]
  %v121 = vld [vmem:[%s2] sm:$0x1]
  %v123 = vlaneseq
  %v124 = vshrl.u32 %v123, 7
  %v125 = vsub.s32 0, %v124
  %v126 = vrot.slane %v121, %v125
  %v132 = vunpack.c.l.b16 %v117
  %v133 = vunpack.c.l.b16 %v118
  %v134 = vunpack.c.l.b16 %v119
  %v135 = vunpack.c.l.b16 %v120
  %v136 = vpack.c.b16 %v133, %v132
  %v137 = vpack.c.b16 %v135, %v134
  %vm140 = vcmask 261120
  %v142 = vsel %vm140, %v85, 0
  %v145 = vsel %vm140, %v86, 0
  %v148 = vsel %vm140, %v87, 0
  %v151 = vsel %vm140, %v88, 0
  %v154 = vsel %vm140, %v89, 0
  %v157 = vsel %vm140, %v90, 0
  %v160 = vsel %vm140, %v91, 0
  %v163 = vsel %vm140, %v92, 0
  %v166 = vsel %vm140, %v93, 0
  %v169 = vsel %vm140, %v94, 0
  %v172 = vsel %vm140, %v95, 0
  %v175 = vsel %vm140, %v96, 0
  %v178 = vsel %vm140, %v97, 0
  %v181 = vsel %vm140, %v98, 0
  %v184 = vsel %vm140, %v99, 0
  %v187 = vsel %vm140, %v100, 0
  %v190 = vsel %vm140, %v101, 0
  %v193 = vsel %vm140, %v102, 0
  %v196 = vsel %vm140, %v103, 0
  %v199 = vsel %vm140, %v104, 0
  %v202 = vsel %vm140, %v105, 0
  %v205 = vsel %vm140, %v106, 0
  %v208 = vsel %vm140, %v107, 0
  %v211 = vsel %vm140, %v108, 0
  %v214 = vsel %vm140, %v109, 0
  %v217 = vsel %vm140, %v110, 0
  %v220 = vsel %vm140, %v111, 0
  %v223 = vsel %vm140, %v112, 0
  %v226 = vsel %vm140, %v113, 0
  %v229 = vsel %vm140, %v114, 0
  %v232 = vsel %vm140, %v115, 0
  %v235 = vsel %vm140, %v116, 0
  %237 = vmatprep.subr.bf16.mxu0 0
  %238 = vmatpush1.bf16.msra.mxu0 0
  %239 = vmatprep.subr.bf16.mxu0 0
  %240 = vmatpush1.bf16.msra.mxu0 0
  %241 = vmatprep.subr.bf16.mxu0 0
  %242 = vmatpush1.bf16.msra.mxu0 0
  %243 = vmatprep.subr.bf16.mxu0 0
  %244 = vmatpush1.bf16.msra.mxu0 0
  %245 = vmatprep.subr.bf16.mxu0 0
  %246 = vmatpush1.bf16.msra.mxu0 0
  %247 = vmatprep.subr.bf16.mxu0 0
  %248 = vmatpush1.bf16.msra.mxu0 0
  %249 = vmatprep.subr.bf16.mxu0 0
  %250 = vmatpush1.bf16.msra.mxu0 %v137
  %251 = vmatprep.subr.bf16.mxu0 0
  %252 = vmatpush1.bf16.msra.mxu0 %v136
  %253 = vmatprep.subr.bf16.mxu0 0
  %254 = vmatpush2.bf16.msra.mxu0 0
  %255 = vmatprep.subr.bf16.mxu0 0
  %256 = vmatpush2.bf16.msra.mxu0 0
  %257 = vmatprep.subr.bf16.mxu0 0
  %258 = vmatpush2.bf16.msra.mxu0 0
  %259 = vmatprep.subr.bf16.mxu0 0
  %260 = vmatpush2.bf16.msra.mxu0 0
  %261 = vmatprep.subr.bf16.mxu0 0
  %262 = vmatpush2.bf16.msra.mxu0 0
  %263 = vmatprep.subr.bf16.mxu0 0
  %264 = vmatpush2.bf16.msra.mxu0 0
  %265 = vmatprep.subr.bf16.mxu0 0
  %266 = vmatpush2.bf16.msra.mxu0 0
  %267 = vmatprep.subr.bf16.mxu0 0
  %268 = vmatpush2.bf16.msra.mxu0 0
  %269 = vmatprep.mubr.bf16.mxu0 0
  %270 = vmatmul.mubr.bf16.gmra.mxu0 %v142
  %v271 = vpop.f32.mrf.mxu0
  %v272 = vadd.f32 %v126, %v271
  %v273 = vpop.f32.mrf.mxu0
  %v274 = vpop.f32.mrf.mxu0
  %v275 = vadd.f32 %v126, %v274
  %v276 = vpop.f32.mrf.mxu0
  %277 = vmatprep.mubr.bf16.mxu0 0
  %278 = vmatmul.mubr.bf16.gmra.mxu0 %v145
  %v279 = vpop.f32.mrf.mxu0
  %v280 = vadd.f32 %v126, %v279
  %v281 = vpop.f32.mrf.mxu0
  %v282 = vpop.f32.mrf.mxu0
  %v283 = vadd.f32 %v126, %v282
  %v284 = vpop.f32.mrf.mxu0
  %285 = vmatprep.mubr.bf16.mxu0 0
  %286 = vmatmul.mubr.bf16.gmra.mxu0 %v148
  %v287 = vpop.f32.mrf.mxu0
  %v288 = vadd.f32 %v126, %v287
  %v289 = vpop.f32.mrf.mxu0
  %v290 = vpop.f32.mrf.mxu0
  %v291 = vadd.f32 %v126, %v290
  %v292 = vpop.f32.mrf.mxu0
  %293 = vmatprep.mubr.bf16.mxu0 0
  %294 = vmatmul.mubr.bf16.gmra.mxu0 %v151
  %v295 = vpop.f32.mrf.mxu0
  %v296 = vadd.f32 %v126, %v295
  %v297 = vpop.f32.mrf.mxu0
  %v298 = vpop.f32.mrf.mxu0
  %v299 = vadd.f32 %v126, %v298
  %v300 = vpop.f32.mrf.mxu0
  %301 = vmatprep.mubr.bf16.mxu0 0
  %302 = vmatmul.mubr.bf16.gmra.mxu0 %v154
  %v303 = vpop.f32.mrf.mxu0
  %v304 = vadd.f32 %v126, %v303
  %v305 = vpop.f32.mrf.mxu0
  %v306 = vpop.f32.mrf.mxu0
  %v307 = vadd.f32 %v126, %v306
  %v308 = vpop.f32.mrf.mxu0
  %309 = vmatprep.mubr.bf16.mxu0 0
  %310 = vmatmul.mubr.bf16.gmra.mxu0 %v157
  %v311 = vpop.f32.mrf.mxu0
  %v312 = vadd.f32 %v126, %v311
  %v313 = vpop.f32.mrf.mxu0
  %v314 = vpop.f32.mrf.mxu0
  %v315 = vadd.f32 %v126, %v314
  %v316 = vpop.f32.mrf.mxu0
  %317 = vmatprep.mubr.bf16.mxu0 0
  %318 = vmatmul.mubr.bf16.gmra.mxu0 %v160
  %v319 = vpop.f32.mrf.mxu0
  %v320 = vadd.f32 %v126, %v319
  %v321 = vpop.f32.mrf.mxu0
  %v322 = vpop.f32.mrf.mxu0
  %v323 = vadd.f32 %v126, %v322
  %v324 = vpop.f32.mrf.mxu0
  %325 = vmatprep.mubr.bf16.mxu0 0
  %326 = vmatmul.mubr.bf16.gmra.mxu0 %v163
  %v327 = vpop.f32.mrf.mxu0
  %v328 = vadd.f32 %v126, %v327
  %v329 = vpop.f32.mrf.mxu0
  %v330 = vpop.f32.mrf.mxu0
  %v331 = vadd.f32 %v126, %v330
  %v332 = vpop.f32.mrf.mxu0
  %333 = vmatprep.mubr.bf16.mxu0 0
  %334 = vmatmul.mubr.bf16.gmra.mxu0 %v166
  %v335 = vpop.f32.mrf.mxu0
  %v336 = vadd.f32 %v126, %v335
  %v337 = vpop.f32.mrf.mxu0
  %v338 = vpop.f32.mrf.mxu0
  %v339 = vadd.f32 %v126, %v338
  %v340 = vpop.f32.mrf.mxu0
  %341 = vmatprep.mubr.bf16.mxu0 0
  %342 = vmatmul.mubr.bf16.gmra.mxu0 %v169
  %v343 = vpop.f32.mrf.mxu0
  %v344 = vadd.f32 %v126, %v343
  %v345 = vpop.f32.mrf.mxu0
  %v346 = vpop.f32.mrf.mxu0
  %v347 = vadd.f32 %v126, %v346
  %v348 = vpop.f32.mrf.mxu0
  %349 = vmatprep.mubr.bf16.mxu0 0
  %350 = vmatmul.mubr.bf16.gmra.mxu0 %v172
  %v351 = vpop.f32.mrf.mxu0
  %v352 = vadd.f32 %v126, %v351
  %v353 = vpop.f32.mrf.mxu0
  %v354 = vpop.f32.mrf.mxu0
  %v355 = vadd.f32 %v126, %v354
  %v356 = vpop.f32.mrf.mxu0
  %357 = vmatprep.mubr.bf16.mxu0 0
  %358 = vmatmul.mubr.bf16.gmra.mxu0 %v175
  %v359 = vpop.f32.mrf.mxu0
  %v360 = vadd.f32 %v126, %v359
  %v361 = vpop.f32.mrf.mxu0
  %v362 = vpop.f32.mrf.mxu0
  %v363 = vadd.f32 %v126, %v362
  %v364 = vpop.f32.mrf.mxu0
  %365 = vmatprep.mubr.bf16.mxu0 0
  %366 = vmatmul.mubr.bf16.gmra.mxu0 %v178
  %v367 = vpop.f32.mrf.mxu0
  %v368 = vadd.f32 %v126, %v367
  %v369 = vpop.f32.mrf.mxu0
  %v370 = vpop.f32.mrf.mxu0
  %v371 = vadd.f32 %v126, %v370
  %v372 = vpop.f32.mrf.mxu0
  %373 = vmatprep.mubr.bf16.mxu0 0
  %374 = vmatmul.mubr.bf16.gmra.mxu0 %v181
  %v375 = vpop.f32.mrf.mxu0
  %v376 = vadd.f32 %v126, %v375
  %v377 = vpop.f32.mrf.mxu0
  %v378 = vpop.f32.mrf.mxu0
  %v379 = vadd.f32 %v126, %v378
  %v380 = vpop.f32.mrf.mxu0
  %381 = vmatprep.mubr.bf16.mxu0 0
  %382 = vmatmul.mubr.bf16.gmra.mxu0 %v184
  %v383 = vpop.f32.mrf.mxu0
  %v384 = vadd.f32 %v126, %v383
  %v385 = vpop.f32.mrf.mxu0
  %v386 = vpop.f32.mrf.mxu0
  %v387 = vadd.f32 %v126, %v386
  %v388 = vpop.f32.mrf.mxu0
  %389 = vmatprep.mubr.bf16.mxu0 0
  %390 = vmatmul.mubr.bf16.gmra.mxu0 %v187
  %v391 = vpop.f32.mrf.mxu0
  %v392 = vadd.f32 %v126, %v391
  %v393 = vpop.f32.mrf.mxu0
  %v394 = vpop.f32.mrf.mxu0
  %v395 = vadd.f32 %v126, %v394
  %v396 = vpop.f32.mrf.mxu0
  %397 = vmatprep.mubr.bf16.mxu0 0
  %398 = vmatmul.mubr.bf16.gmra.mxu0 %v190
  %v399 = vpop.f32.mrf.mxu0
  %v400 = vadd.f32 %v126, %v399
  %v401 = vpop.f32.mrf.mxu0
  %v402 = vpop.f32.mrf.mxu0
  %v403 = vadd.f32 %v126, %v402
  %v404 = vpop.f32.mrf.mxu0
  %405 = vmatprep.mubr.bf16.mxu0 0
  %406 = vmatmul.mubr.bf16.gmra.mxu0 %v193
  %v407 = vpop.f32.mrf.mxu0
  %v408 = vadd.f32 %v126, %v407
  %v409 = vpop.f32.mrf.mxu0
  %v410 = vpop.f32.mrf.mxu0
  %v411 = vadd.f32 %v126, %v410
  %v412 = vpop.f32.mrf.mxu0
  %413 = vmatprep.mubr.bf16.mxu0 0
  %414 = vmatmul.mubr.bf16.gmra.mxu0 %v196
  %v415 = vpop.f32.mrf.mxu0
  %v416 = vadd.f32 %v126, %v415
  %v417 = vpop.f32.mrf.mxu0
  %v418 = vpop.f32.mrf.mxu0
  %v419 = vadd.f32 %v126, %v418
  %v420 = vpop.f32.mrf.mxu0
  %421 = vmatprep.mubr.bf16.mxu0 0
  %422 = vmatmul.mubr.bf16.gmra.mxu0 %v199
  %v423 = vpop.f32.mrf.mxu0
  %v424 = vadd.f32 %v126, %v423
  %v425 = vpop.f32.mrf.mxu0
  %v426 = vpop.f32.mrf.mxu0
  %v427 = vadd.f32 %v126, %v426
  %v428 = vpop.f32.mrf.mxu0
  %429 = vmatprep.mubr.bf16.mxu0 0
  %430 = vmatmul.mubr.bf16.gmra.mxu0 %v202
  %v431 = vpop.f32.mrf.mxu0
  %v432 = vadd.f32 %v126, %v431
  %v433 = vpop.f32.mrf.mxu0
  %v434 = vpop.f32.mrf.mxu0
  %v435 = vadd.f32 %v126, %v434
  %v436 = vpop.f32.mrf.mxu0
  %437 = vmatprep.mubr.bf16.mxu0 0
  %438 = vmatmul.mubr.bf16.gmra.mxu0 %v205
  %v439 = vpop.f32.mrf.mxu0
  %v440 = vadd.f32 %v126, %v439
  %v441 = vpop.f32.mrf.mxu0
  %v442 = vpop.f32.mrf.mxu0
  %v443 = vadd.f32 %v126, %v442
  %v444 = vpop.f32.mrf.mxu0
  %445 = vmatprep.mubr.bf16.mxu0 0
  %446 = vmatmul.mubr.bf16.gmra.mxu0 %v208
  %v447 = vpop.f32.mrf.mxu0
  %v448 = vadd.f32 %v126, %v447
  %v449 = vpop.f32.mrf.mxu0
  %v450 = vpop.f32.mrf.mxu0
  %v451 = vadd.f32 %v126, %v450
  %v452 = vpop.f32.mrf.mxu0
  %453 = vmatprep.mubr.bf16.mxu0 0
  %454 = vmatmul.mubr.bf16.gmra.mxu0 %v211
  %v455 = vpop.f32.mrf.mxu0
  %v456 = vadd.f32 %v126, %v455
  %v457 = vpop.f32.mrf.mxu0
  %v458 = vpop.f32.mrf.mxu0
  %v459 = vadd.f32 %v126, %v458
  %v460 = vpop.f32.mrf.mxu0
  %461 = vmatprep.mubr.bf16.mxu0 0
  %462 = vmatmul.mubr.bf16.gmra.mxu0 %v214
  %v463 = vpop.f32.mrf.mxu0
  %v464 = vadd.f32 %v126, %v463
  %v465 = vpop.f32.mrf.mxu0
  %v466 = vpop.f32.mrf.mxu0
  %v467 = vadd.f32 %v126, %v466
  %v468 = vpop.f32.mrf.mxu0
  %469 = vmatprep.mubr.bf16.mxu0 0
  %470 = vmatmul.mubr.bf16.gmra.mxu0 %v217
  %v471 = vpop.f32.mrf.mxu0
  %v472 = vadd.f32 %v126, %v471
  %v473 = vpop.f32.mrf.mxu0
  %v474 = vpop.f32.mrf.mxu0
  %v475 = vadd.f32 %v126, %v474
  %v476 = vpop.f32.mrf.mxu0
  %477 = vmatprep.mubr.bf16.mxu0 0
  %478 = vmatmul.mubr.bf16.gmra.mxu0 %v220
  %v479 = vpop.f32.mrf.mxu0
  %v480 = vadd.f32 %v126, %v479
  %v481 = vpop.f32.mrf.mxu0
  %v482 = vpop.f32.mrf.mxu0
  %v483 = vadd.f32 %v126, %v482
  %v484 = vpop.f32.mrf.mxu0
  %485 = vmatprep.mubr.bf16.mxu0 0
  %486 = vmatmul.mubr.bf16.gmra.mxu0 %v223
  %v487 = vpop.f32.mrf.mxu0
  %v488 = vadd.f32 %v126, %v487
  %v489 = vpop.f32.mrf.mxu0
  %v490 = vpop.f32.mrf.mxu0
  %v491 = vadd.f32 %v126, %v490
  %v492 = vpop.f32.mrf.mxu0
  %493 = vmatprep.mubr.bf16.mxu0 0
  %494 = vmatmul.mubr.bf16.gmra.mxu0 %v226
  %v495 = vpop.f32.mrf.mxu0
  %v496 = vadd.f32 %v126, %v495
  %v497 = vpop.f32.mrf.mxu0
  %v498 = vpop.f32.mrf.mxu0
  %v499 = vadd.f32 %v126, %v498
  %v500 = vpop.f32.mrf.mxu0
  %501 = vmatprep.mubr.bf16.mxu0 0
  %502 = vmatmul.mubr.bf16.gmra.mxu0 %v229
  %v503 = vpop.f32.mrf.mxu0
  %v504 = vadd.f32 %v126, %v503
  %v505 = vpop.f32.mrf.mxu0
  %v506 = vpop.f32.mrf.mxu0
  %v507 = vadd.f32 %v126, %v506
  %v508 = vpop.f32.mrf.mxu0
  %509 = vmatprep.mubr.bf16.mxu0 0
  %510 = vmatmul.mubr.bf16.gmra.mxu0 %v232
  %v511 = vpop.f32.mrf.mxu0
  %v512 = vadd.f32 %v126, %v511
  %v513 = vpop.f32.mrf.mxu0
  %v514 = vpop.f32.mrf.mxu0
  %v515 = vadd.f32 %v126, %v514
  %v516 = vpop.f32.mrf.mxu0
  %517 = vmatprep.mubr.bf16.mxu0 0
  %518 = vmatmul.mubr.bf16.gmra.mxu0 %v235
  %v519 = vpop.f32.mrf.mxu0
  %v520 = vadd.f32 %v126, %v519
  %v521 = vpop.f32.mrf.mxu0
  %v522 = vpop.f32.mrf.mxu0
  %v523 = vadd.f32 %v126, %v522
  %v524 = vpop.f32.mrf.mxu0
  %525 = vdwg.mxu0
  %v526 = vxor.u32 %v272, 2147483648
  %v527 = vxor.u32 %v275, 2147483648
  %v528 = vxor.u32 %v280, 2147483648
  %v529 = vxor.u32 %v283, 2147483648
  %v530 = vxor.u32 %v288, 2147483648
  %v531 = vxor.u32 %v291, 2147483648
  %v532 = vxor.u32 %v296, 2147483648
  %v533 = vxor.u32 %v299, 2147483648
  %v534 = vxor.u32 %v304, 2147483648
  %v535 = vxor.u32 %v307, 2147483648
  %v536 = vxor.u32 %v312, 2147483648
  %v537 = vxor.u32 %v315, 2147483648
  %v538 = vxor.u32 %v320, 2147483648
  %v539 = vxor.u32 %v323, 2147483648
  %v540 = vxor.u32 %v328, 2147483648
  %v541 = vxor.u32 %v331, 2147483648
  %v542 = vxor.u32 %v336, 2147483648
  %v543 = vxor.u32 %v339, 2147483648
  %v544 = vxor.u32 %v344, 2147483648
  %v545 = vxor.u32 %v347, 2147483648
  %v546 = vxor.u32 %v352, 2147483648
  %v547 = vxor.u32 %v355, 2147483648
  %v548 = vxor.u32 %v360, 2147483648
  %v549 = vxor.u32 %v363, 2147483648
  %v550 = vxor.u32 %v368, 2147483648
  %v551 = vxor.u32 %v371, 2147483648
  %v552 = vxor.u32 %v376, 2147483648
  %v553 = vxor.u32 %v379, 2147483648
  %v554 = vxor.u32 %v384, 2147483648
  %v555 = vxor.u32 %v387, 2147483648
  %v556 = vxor.u32 %v392, 2147483648
  %v557 = vxor.u32 %v395, 2147483648
  %v558 = vxor.u32 %v400, 2147483648
  %v559 = vxor.u32 %v403, 2147483648
  %v560 = vxor.u32 %v408, 2147483648
  %v561 = vxor.u32 %v411, 2147483648
  %v562 = vxor.u32 %v416, 2147483648
  %v563 = vxor.u32 %v419, 2147483648
  %v564 = vxor.u32 %v424, 2147483648
  %v565 = vxor.u32 %v427, 2147483648
  %v566 = vxor.u32 %v432, 2147483648
  %v567 = vxor.u32 %v435, 2147483648
  %v568 = vxor.u32 %v440, 2147483648
  %v569 = vxor.u32 %v443, 2147483648
  %v570 = vxor.u32 %v448, 2147483648
  %v571 = vxor.u32 %v451, 2147483648
  %v572 = vxor.u32 %v456, 2147483648
  %v573 = vxor.u32 %v459, 2147483648
  %v574 = vxor.u32 %v464, 2147483648
  %v575 = vxor.u32 %v467, 2147483648
  %v576 = vxor.u32 %v472, 2147483648
  %v577 = vxor.u32 %v475, 2147483648
  %v578 = vxor.u32 %v480, 2147483648
  %v579 = vxor.u32 %v483, 2147483648
  %v580 = vxor.u32 %v488, 2147483648
  %v581 = vxor.u32 %v491, 2147483648
  %v582 = vxor.u32 %v496, 2147483648
  %v583 = vxor.u32 %v499, 2147483648
  %v584 = vxor.u32 %v504, 2147483648
  %v585 = vxor.u32 %v507, 2147483648
  %v586 = vxor.u32 %v512, 2147483648
  %v587 = vxor.u32 %v515, 2147483648
  %v588 = vxor.u32 %v520, 2147483648
  %v589 = vxor.u32 %v523, 2147483648
  %v590 = vmul.f32 %v526, 1.442695
  %v591 = vpow.pop %v590
  %v592 = vmul.f32 %v527, 1.442695
  %v593 = vpow.pop %v592
  %v594 = vmul.f32 %v528, 1.442695
  %v595 = vpow.pop %v594
  %v596 = vmul.f32 %v529, 1.442695
  %v597 = vpow.pop %v596
  %v598 = vmul.f32 %v530, 1.442695
  %v599 = vpow.pop %v598
  %v600 = vmul.f32 %v531, 1.442695
  %v601 = vpow.pop %v600
  %v602 = vmul.f32 %v532, 1.442695
  %v603 = vpow.pop %v602
  %v604 = vmul.f32 %v533, 1.442695
  %v605 = vpow.pop %v604
  %v606 = vmul.f32 %v534, 1.442695
  %v607 = vpow.pop %v606
  %v608 = vmul.f32 %v535, 1.442695
  %v609 = vpow.pop %v608
  %v610 = vmul.f32 %v536, 1.442695
  %v611 = vpow.pop %v610
  %v612 = vmul.f32 %v537, 1.442695
  %v613 = vpow.pop %v612
  %v614 = vmul.f32 %v538, 1.442695
  %v615 = vpow.pop %v614
  %v616 = vmul.f32 %v539, 1.442695
  %v617 = vpow.pop %v616
  %v618 = vmul.f32 %v540, 1.442695
  %v619 = vpow.pop %v618
  %v620 = vmul.f32 %v541, 1.442695
  %v621 = vpow.pop %v620
  %v622 = vmul.f32 %v542, 1.442695
  %v623 = vpow.pop %v622
  %v624 = vmul.f32 %v543, 1.442695
  %v625 = vpow.pop %v624
  %v626 = vmul.f32 %v544, 1.442695
  %v627 = vpow.pop %v626
  %v628 = vmul.f32 %v545, 1.442695
  %v629 = vpow.pop %v628
  %v630 = vmul.f32 %v546, 1.442695
  %v631 = vpow.pop %v630
  %v632 = vmul.f32 %v547, 1.442695
  %v633 = vpow.pop %v632
  %v634 = vmul.f32 %v548, 1.442695
  %v635 = vpow.pop %v634
  %v636 = vmul.f32 %v549, 1.442695
  %v637 = vpow.pop %v636
  %v638 = vmul.f32 %v550, 1.442695
  %v639 = vpow.pop %v638
  %v640 = vmul.f32 %v551, 1.442695
  %v641 = vpow.pop %v640
  %v642 = vmul.f32 %v552, 1.442695
  %v643 = vpow.pop %v642
  %v644 = vmul.f32 %v553, 1.442695
  %v645 = vpow.pop %v644
  %v646 = vmul.f32 %v554, 1.442695
  %v647 = vpow.pop %v646
  %v648 = vmul.f32 %v555, 1.442695
  %v649 = vpow.pop %v648
  %v650 = vmul.f32 %v556, 1.442695
  %v651 = vpow.pop %v650
  %v652 = vmul.f32 %v557, 1.442695
  %v653 = vpow.pop %v652
  %v654 = vmul.f32 %v558, 1.442695
  %v655 = vpow.pop %v654
  %v656 = vmul.f32 %v559, 1.442695
  %v657 = vpow.pop %v656
  %v658 = vmul.f32 %v560, 1.442695
  %v659 = vpow.pop %v658
  %v660 = vmul.f32 %v561, 1.442695
  %v661 = vpow.pop %v660
  %v662 = vmul.f32 %v562, 1.442695
  %v663 = vpow.pop %v662
  %v664 = vmul.f32 %v563, 1.442695
  %v665 = vpow.pop %v664
  %v666 = vmul.f32 %v564, 1.442695
  %v667 = vpow.pop %v666
  %v668 = vmul.f32 %v565, 1.442695
  %v669 = vpow.pop %v668
  %v670 = vmul.f32 %v566, 1.442695
  %v671 = vpow.pop %v670
  %v672 = vmul.f32 %v567, 1.442695
  %v673 = vpow.pop %v672
  %v674 = vmul.f32 %v568, 1.442695
  %v675 = vpow.pop %v674
  %v676 = vmul.f32 %v569, 1.442695
  %v677 = vpow.pop %v676
  %v678 = vmul.f32 %v570, 1.442695
  %v679 = vpow.pop %v678
  %v680 = vmul.f32 %v571, 1.442695
  %v681 = vpow.pop %v680
  %v682 = vmul.f32 %v572, 1.442695
  %v683 = vpow.pop %v682
  %v684 = vmul.f32 %v573, 1.442695
  %v685 = vpow.pop %v684
  %v686 = vmul.f32 %v574, 1.442695
  %v687 = vpow.pop %v686
  %v688 = vmul.f32 %v575, 1.442695
  %v689 = vpow.pop %v688
  %v690 = vmul.f32 %v576, 1.442695
  %v691 = vpow.pop %v690
  %v692 = vmul.f32 %v577, 1.442695
  %v693 = vpow.pop %v692
  %v694 = vmul.f32 %v578, 1.442695
  %v695 = vpow.pop %v694
  %v696 = vmul.f32 %v579, 1.442695
  %v697 = vpow.pop %v696
  %v698 = vmul.f32 %v580, 1.442695
  %v699 = vpow.pop %v698
  %v700 = vmul.f32 %v581, 1.442695
  %v701 = vpow.pop %v700
  %v702 = vmul.f32 %v582, 1.442695
  %v703 = vpow.pop %v702
  %v704 = vmul.f32 %v583, 1.442695
  %v705 = vpow.pop %v704
  %v706 = vmul.f32 %v584, 1.442695
  %v707 = vpow.pop %v706
  %v708 = vmul.f32 %v585, 1.442695
  %v709 = vpow.pop %v708
  %v710 = vmul.f32 %v586, 1.442695
  %v711 = vpow.pop %v710
  %v712 = vmul.f32 %v587, 1.442695
  %v713 = vpow.pop %v712
  %v714 = vmul.f32 %v588, 1.442695
  %v715 = vpow.pop %v714
  %v716 = vmul.f32 %v589, 1.442695
  %v717 = vpow.pop %v716
  %v718 = vadd.f32 %v591, 1.0
  %v719 = vadd.f32 %v593, 1.0
  %v720 = vadd.f32 %v595, 1.0
  %v721 = vadd.f32 %v597, 1.0
  %v722 = vadd.f32 %v599, 1.0
  %v723 = vadd.f32 %v601, 1.0
  %v724 = vadd.f32 %v603, 1.0
  %v725 = vadd.f32 %v605, 1.0
  %v726 = vadd.f32 %v607, 1.0
  %v727 = vadd.f32 %v609, 1.0
  %v728 = vadd.f32 %v611, 1.0
  %v729 = vadd.f32 %v613, 1.0
  %v730 = vadd.f32 %v615, 1.0
  %v731 = vadd.f32 %v617, 1.0
  %v732 = vadd.f32 %v619, 1.0
  %v733 = vadd.f32 %v621, 1.0
  %v734 = vadd.f32 %v623, 1.0
  %v735 = vadd.f32 %v625, 1.0
  %v736 = vadd.f32 %v627, 1.0
  %v737 = vadd.f32 %v629, 1.0
  %v738 = vadd.f32 %v631, 1.0
  %v739 = vadd.f32 %v633, 1.0
  %v740 = vadd.f32 %v635, 1.0
  %v741 = vadd.f32 %v637, 1.0
  %v742 = vadd.f32 %v639, 1.0
  %v743 = vadd.f32 %v641, 1.0
  %v744 = vadd.f32 %v643, 1.0
  %v745 = vadd.f32 %v645, 1.0
  %v746 = vadd.f32 %v647, 1.0
  %v747 = vadd.f32 %v649, 1.0
  %v748 = vadd.f32 %v651, 1.0
  %v749 = vadd.f32 %v653, 1.0
  %v750 = vadd.f32 %v655, 1.0
  %v751 = vadd.f32 %v657, 1.0
  %v752 = vadd.f32 %v659, 1.0
  %v753 = vadd.f32 %v661, 1.0
  %v754 = vadd.f32 %v663, 1.0
  %v755 = vadd.f32 %v665, 1.0
  %v756 = vadd.f32 %v667, 1.0
  %v757 = vadd.f32 %v669, 1.0
  %v758 = vadd.f32 %v671, 1.0
  %v759 = vadd.f32 %v673, 1.0
  %v760 = vadd.f32 %v675, 1.0
  %v761 = vadd.f32 %v677, 1.0
  %v762 = vadd.f32 %v679, 1.0
  %v763 = vadd.f32 %v681, 1.0
  %v764 = vadd.f32 %v683, 1.0
  %v765 = vadd.f32 %v685, 1.0
  %v766 = vadd.f32 %v687, 1.0
  %v767 = vadd.f32 %v689, 1.0
  %v768 = vadd.f32 %v691, 1.0
  %v769 = vadd.f32 %v693, 1.0
  %v770 = vadd.f32 %v695, 1.0
  %v771 = vadd.f32 %v697, 1.0
  %v772 = vadd.f32 %v699, 1.0
  %v773 = vadd.f32 %v701, 1.0
  %v774 = vadd.f32 %v703, 1.0
  %v775 = vadd.f32 %v705, 1.0
  %v776 = vadd.f32 %v707, 1.0
  %v777 = vadd.f32 %v709, 1.0
  %v778 = vadd.f32 %v711, 1.0
  %v779 = vadd.f32 %v713, 1.0
  %v780 = vadd.f32 %v715, 1.0
  %v781 = vadd.f32 %v717, 1.0
  %v782 = vrcp.pop %v718
  %v783 = vmul.f32 1.0, %v782
  %v784 = vrcp.pop %v719
  %v785 = vmul.f32 1.0, %v784
  %v786 = vrcp.pop %v720
  %v787 = vmul.f32 1.0, %v786
  %v788 = vrcp.pop %v721
  %v789 = vmul.f32 1.0, %v788
  %v790 = vrcp.pop %v722
  %v791 = vmul.f32 1.0, %v790
  %v792 = vrcp.pop %v723
  %v793 = vmul.f32 1.0, %v792
  %v794 = vrcp.pop %v724
  %v795 = vmul.f32 1.0, %v794
  %v796 = vrcp.pop %v725
  %v797 = vmul.f32 1.0, %v796
  %v798 = vrcp.pop %v726
  %v799 = vmul.f32 1.0, %v798
  %v800 = vrcp.pop %v727
  %v801 = vmul.f32 1.0, %v800
  %v802 = vrcp.pop %v728
  %v803 = vmul.f32 1.0, %v802
  %v804 = vrcp.pop %v729
  %v805 = vmul.f32 1.0, %v804
  %v806 = vrcp.pop %v730
  %v807 = vmul.f32 1.0, %v806
  %v808 = vrcp.pop %v731
  %v809 = vmul.f32 1.0, %v808
  %v810 = vrcp.pop %v732
  %v811 = vmul.f32 1.0, %v810
  %v812 = vrcp.pop %v733
  %v813 = vmul.f32 1.0, %v812
  %v814 = vrcp.pop %v734
  %v815 = vmul.f32 1.0, %v814
  %v816 = vrcp.pop %v735
  %v817 = vmul.f32 1.0, %v816
  %v818 = vrcp.pop %v736
  %v819 = vmul.f32 1.0, %v818
  %v820 = vrcp.pop %v737
  %v821 = vmul.f32 1.0, %v820
  %v822 = vrcp.pop %v738
  %v823 = vmul.f32 1.0, %v822
  %v824 = vrcp.pop %v739
  %v825 = vmul.f32 1.0, %v824
  %v826 = vrcp.pop %v740
  %v827 = vmul.f32 1.0, %v826
  %v828 = vrcp.pop %v741
  %v829 = vmul.f32 1.0, %v828
  %v830 = vrcp.pop %v742
  %v831 = vmul.f32 1.0, %v830
  %v832 = vrcp.pop %v743
  %v833 = vmul.f32 1.0, %v832
  %v834 = vrcp.pop %v744
  %v835 = vmul.f32 1.0, %v834
  %v836 = vrcp.pop %v745
  %v837 = vmul.f32 1.0, %v836
  %v838 = vrcp.pop %v746
  %v839 = vmul.f32 1.0, %v838
  %v840 = vrcp.pop %v747
  %v841 = vmul.f32 1.0, %v840
  %v842 = vrcp.pop %v748
  %v843 = vmul.f32 1.0, %v842
  %v844 = vrcp.pop %v749
  %v845 = vmul.f32 1.0, %v844
  %v846 = vrcp.pop %v750
  %v847 = vmul.f32 1.0, %v846
  %v848 = vrcp.pop %v751
  %v849 = vmul.f32 1.0, %v848
  %v850 = vrcp.pop %v752
  %v851 = vmul.f32 1.0, %v850
  %v852 = vrcp.pop %v753
  %v853 = vmul.f32 1.0, %v852
  %v854 = vrcp.pop %v754
  %v855 = vmul.f32 1.0, %v854
  %v856 = vrcp.pop %v755
  %v857 = vmul.f32 1.0, %v856
  %v858 = vrcp.pop %v756
  %v859 = vmul.f32 1.0, %v858
  %v860 = vrcp.pop %v757
  %v861 = vmul.f32 1.0, %v860
  %v862 = vrcp.pop %v758
  %v863 = vmul.f32 1.0, %v862
  %v864 = vrcp.pop %v759
  %v865 = vmul.f32 1.0, %v864
  %v866 = vrcp.pop %v760
  %v867 = vmul.f32 1.0, %v866
  %v868 = vrcp.pop %v761
  %v869 = vmul.f32 1.0, %v868
  %v870 = vrcp.pop %v762
  %v871 = vmul.f32 1.0, %v870
  %v872 = vrcp.pop %v763
  %v873 = vmul.f32 1.0, %v872
  %v874 = vrcp.pop %v764
  %v875 = vmul.f32 1.0, %v874
  %v876 = vrcp.pop %v765
  %v877 = vmul.f32 1.0, %v876
  %v878 = vrcp.pop %v766
  %v879 = vmul.f32 1.0, %v878
  %v880 = vrcp.pop %v767
  %v881 = vmul.f32 1.0, %v880
  %v882 = vrcp.pop %v768
  %v883 = vmul.f32 1.0, %v882
  %v884 = vrcp.pop %v769
  %v885 = vmul.f32 1.0, %v884
  %v886 = vrcp.pop %v770
  %v887 = vmul.f32 1.0, %v886
  %v888 = vrcp.pop %v771
  %v889 = vmul.f32 1.0, %v888
  %v890 = vrcp.pop %v772
  %v891 = vmul.f32 1.0, %v890
  %v892 = vrcp.pop %v773
  %v893 = vmul.f32 1.0, %v892
  %v894 = vrcp.pop %v774
  %v895 = vmul.f32 1.0, %v894
  %v896 = vrcp.pop %v775
  %v897 = vmul.f32 1.0, %v896
  %v898 = vrcp.pop %v776
  %v899 = vmul.f32 1.0, %v898
  %v900 = vrcp.pop %v777
  %v901 = vmul.f32 1.0, %v900
  %v902 = vrcp.pop %v778
  %v903 = vmul.f32 1.0, %v902
  %v904 = vrcp.pop %v779
  %v905 = vmul.f32 1.0, %v904
  %v906 = vrcp.pop %v780
  %v907 = vmul.f32 1.0, %v906
  %v908 = vrcp.pop %v781
  %v909 = vmul.f32 1.0, %v908
  %v910 = vpack.c.bf16 %v785, %v783
  %v911 = vpack.c.bf16 %v789, %v787
  %v912 = vpack.c.bf16 %v793, %v791
  %v913 = vpack.c.bf16 %v797, %v795
  %v914 = vpack.c.bf16 %v801, %v799
  %v915 = vpack.c.bf16 %v805, %v803
  %v916 = vpack.c.bf16 %v809, %v807
  %v917 = vpack.c.bf16 %v813, %v811
  %v918 = vpack.c.bf16 %v817, %v815
  %v919 = vpack.c.bf16 %v821, %v819
  %v920 = vpack.c.bf16 %v825, %v823
  %v921 = vpack.c.bf16 %v829, %v827
  %v922 = vpack.c.bf16 %v833, %v831
  %v923 = vpack.c.bf16 %v837, %v835
  %v924 = vpack.c.bf16 %v841, %v839
  %v925 = vpack.c.bf16 %v845, %v843
  %v926 = vpack.c.bf16 %v849, %v847
  %v927 = vpack.c.bf16 %v853, %v851
  %v928 = vpack.c.bf16 %v857, %v855
  %v929 = vpack.c.bf16 %v861, %v859
  %v930 = vpack.c.bf16 %v865, %v863
  %v931 = vpack.c.bf16 %v869, %v867
  %v932 = vpack.c.bf16 %v873, %v871
  %v933 = vpack.c.bf16 %v877, %v875
  %v934 = vpack.c.bf16 %v881, %v879
  %v935 = vpack.c.bf16 %v885, %v883
  %v936 = vpack.c.bf16 %v889, %v887
  %v937 = vpack.c.bf16 %v893, %v891
  %v938 = vpack.c.bf16 %v897, %v895
  %v939 = vpack.c.bf16 %v901, %v899
  %v940 = vpack.c.bf16 %v905, %v903
  %v941 = vpack.c.bf16 %v909, %v907
  %v942 = vld [vmem:[%s3] sm:$0xf]
  %v943 = vld [vmem:[%s3 + $0x4] sm:$0xf]
  %v944 = vld [vmem:[%s3 + $0x8] sm:$0xf]
  %v945 = vld [vmem:[%s3 + $0xc] sm:$0xf]
  %v946 = vld [vmem:[%s3 + $0x10] sm:$0xf]
  %v947 = vld [vmem:[%s3 + $0x14] sm:$0xf]
  %v948 = vld [vmem:[%s3 + $0x18] sm:$0xf]
  %v949 = vld [vmem:[%s3 + $0x1c] sm:$0xf]
  %v950 = vld [vmem:[%s3 + $0x20] sm:$0xf]
  %v951 = vld [vmem:[%s3 + $0x24] sm:$0xf]
  %v952 = vld [vmem:[%s3 + $0x28] sm:$0xf]
  %v953 = vld [vmem:[%s3 + $0x2c] sm:$0xf]
  %v954 = vld [vmem:[%s3 + $0x30] sm:$0xf]
  %v955 = vld [vmem:[%s3 + $0x34] sm:$0xf]
  %v956 = vld [vmem:[%s3 + $0x38] sm:$0xf]
  %v957 = vld [vmem:[%s3 + $0x3c] sm:$0xf]
  %v958 = vld [vmem:[%s4] sm:$0x1]
  %v960 = vlaneseq
  %v961 = vshrl.u32 %v960, 7
  %v962 = vsub.s32 0, %v961
  %v963 = vrot.slane %v958, %v962
  %v981 = vunpack.c.l.b16 %v942
  %v982 = vunpack.c.l.b16 %v943
  %v983 = vunpack.c.l.b16 %v944
  %v984 = vunpack.c.l.b16 %v945
  %v985 = vunpack.c.l.b16 %v946
  %v986 = vunpack.c.l.b16 %v947
  %v987 = vunpack.c.l.b16 %v948
  %v988 = vunpack.c.l.b16 %v949
  %v989 = vunpack.c.l.b16 %v950
  %v990 = vunpack.c.l.b16 %v951
  %v991 = vunpack.c.l.b16 %v952
  %v992 = vunpack.c.l.b16 %v953
  %v993 = vunpack.c.l.b16 %v954
  %v994 = vunpack.c.l.b16 %v955
  %v995 = vunpack.c.l.b16 %v956
  %v996 = vunpack.c.l.b16 %v957
  %v997 = vpack.c.b16 %v982, %v981
  %v998 = vpack.c.b16 %v984, %v983
  %v999 = vpack.c.b16 %v986, %v985
  %v1000 = vpack.c.b16 %v988, %v987
  %v1001 = vpack.c.b16 %v990, %v989
  %v1002 = vpack.c.b16 %v992, %v991
  %v1003 = vpack.c.b16 %v994, %v993
  %v1004 = vpack.c.b16 %v996, %v995
  %1013 = vmatprep.subr.bf16.mxu0 0
  %1014 = vmatpush1.bf16.msra.mxu0 %v1004
  %1015 = vmatprep.subr.bf16.mxu0 0
  %1016 = vmatpush1.bf16.msra.mxu0 %v1003
  %1017 = vmatprep.subr.bf16.mxu0 0
  %1018 = vmatpush1.bf16.msra.mxu0 %v1002
  %1019 = vmatprep.subr.bf16.mxu0 0
  %1020 = vmatpush1.bf16.msra.mxu0 %v1001
  %1021 = vmatprep.subr.bf16.mxu0 0
  %1022 = vmatpush1.bf16.msra.mxu0 %v1000
  %1023 = vmatprep.subr.bf16.mxu0 0
  %1024 = vmatpush1.bf16.msra.mxu0 %v999
  %1025 = vmatprep.subr.bf16.mxu0 0
  %1026 = vmatpush1.bf16.msra.mxu0 %v998
  %1027 = vmatprep.subr.bf16.mxu0 0
  %1028 = vmatpush1.bf16.msra.mxu0 %v997
  %1029 = vmatprep.subr.bf16.mxu0 0
  %1030 = vmatpush2.bf16.msra.mxu0 0
  %1031 = vmatprep.subr.bf16.mxu0 0
  %1032 = vmatpush2.bf16.msra.mxu0 0
  %1033 = vmatprep.subr.bf16.mxu0 0
  %1034 = vmatpush2.bf16.msra.mxu0 0
  %1035 = vmatprep.subr.bf16.mxu0 0
  %1036 = vmatpush2.bf16.msra.mxu0 0
  %1037 = vmatprep.subr.bf16.mxu0 0
  %1038 = vmatpush2.bf16.msra.mxu0 0
  %1039 = vmatprep.subr.bf16.mxu0 0
  %1040 = vmatpush2.bf16.msra.mxu0 0
  %1041 = vmatprep.subr.bf16.mxu0 0
  %1042 = vmatpush2.bf16.msra.mxu0 0
  %1043 = vmatprep.subr.bf16.mxu0 0
  %1044 = vmatpush2.bf16.msra.mxu0 0
  %1045 = vmatprep.mubr.bf16.mxu0 0
  %1046 = vmatmul.mubr.bf16.gmra.mxu0 %v910
  %v1047 = vpop.f32.mrf.mxu0
  %v1048 = vadd.f32 %v963, %v1047
  %v1049 = vpop.f32.mrf.mxu0
  %v1050 = vpop.f32.mrf.mxu0
  %v1051 = vadd.f32 %v963, %v1050
  %v1052 = vpop.f32.mrf.mxu0
  %1053 = vmatprep.mubr.bf16.mxu0 0
  %1054 = vmatmul.mubr.bf16.gmra.mxu0 %v911
  %v1055 = vpop.f32.mrf.mxu0
  %v1056 = vadd.f32 %v963, %v1055
  %v1057 = vpop.f32.mrf.mxu0
  %v1058 = vpop.f32.mrf.mxu0
  %v1059 = vadd.f32 %v963, %v1058
  %v1060 = vpop.f32.mrf.mxu0
  %1061 = vmatprep.mubr.bf16.mxu0 0
  %1062 = vmatmul.mubr.bf16.gmra.mxu0 %v912
  %v1063 = vpop.f32.mrf.mxu0
  %v1064 = vadd.f32 %v963, %v1063
  %v1065 = vpop.f32.mrf.mxu0
  %v1066 = vpop.f32.mrf.mxu0
  %v1067 = vadd.f32 %v963, %v1066
  %v1068 = vpop.f32.mrf.mxu0
  %1069 = vmatprep.mubr.bf16.mxu0 0
  %1070 = vmatmul.mubr.bf16.gmra.mxu0 %v913
  %v1071 = vpop.f32.mrf.mxu0
  %v1072 = vadd.f32 %v963, %v1071
  %v1073 = vpop.f32.mrf.mxu0
  %v1074 = vpop.f32.mrf.mxu0
  %v1075 = vadd.f32 %v963, %v1074
  %v1076 = vpop.f32.mrf.mxu0
  %1077 = vmatprep.mubr.bf16.mxu0 0
  %1078 = vmatmul.mubr.bf16.gmra.mxu0 %v914
  %v1079 = vpop.f32.mrf.mxu0
  %v1080 = vadd.f32 %v963, %v1079
  %v1081 = vpop.f32.mrf.mxu0
  %v1082 = vpop.f32.mrf.mxu0
  %v1083 = vadd.f32 %v963, %v1082
  %v1084 = vpop.f32.mrf.mxu0
  %1085 = vmatprep.mubr.bf16.mxu0 0
  %1086 = vmatmul.mubr.bf16.gmra.mxu0 %v915
  %v1087 = vpop.f32.mrf.mxu0
  %v1088 = vadd.f32 %v963, %v1087
  %v1089 = vpop.f32.mrf.mxu0
  %v1090 = vpop.f32.mrf.mxu0
  %v1091 = vadd.f32 %v963, %v1090
  %v1092 = vpop.f32.mrf.mxu0
  %1093 = vmatprep.mubr.bf16.mxu0 0
  %1094 = vmatmul.mubr.bf16.gmra.mxu0 %v916
  %v1095 = vpop.f32.mrf.mxu0
  %v1096 = vadd.f32 %v963, %v1095
  %v1097 = vpop.f32.mrf.mxu0
  %v1098 = vpop.f32.mrf.mxu0
  %v1099 = vadd.f32 %v963, %v1098
  %v1100 = vpop.f32.mrf.mxu0
  %1101 = vmatprep.mubr.bf16.mxu0 0
  %1102 = vmatmul.mubr.bf16.gmra.mxu0 %v917
  %v1103 = vpop.f32.mrf.mxu0
  %v1104 = vadd.f32 %v963, %v1103
  %v1105 = vpop.f32.mrf.mxu0
  %v1106 = vpop.f32.mrf.mxu0
  %v1107 = vadd.f32 %v963, %v1106
  %v1108 = vpop.f32.mrf.mxu0
  %1109 = vmatprep.mubr.bf16.mxu0 0
  %1110 = vmatmul.mubr.bf16.gmra.mxu0 %v918
  %v1111 = vpop.f32.mrf.mxu0
  %v1112 = vadd.f32 %v963, %v1111
  %v1113 = vpop.f32.mrf.mxu0
  %v1114 = vpop.f32.mrf.mxu0
  %v1115 = vadd.f32 %v963, %v1114
  %v1116 = vpop.f32.mrf.mxu0
  %1117 = vmatprep.mubr.bf16.mxu0 0
  %1118 = vmatmul.mubr.bf16.gmra.mxu0 %v919
  %v1119 = vpop.f32.mrf.mxu0
  %v1120 = vadd.f32 %v963, %v1119
  %v1121 = vpop.f32.mrf.mxu0
  %v1122 = vpop.f32.mrf.mxu0
  %v1123 = vadd.f32 %v963, %v1122
  %v1124 = vpop.f32.mrf.mxu0
  %1125 = vmatprep.mubr.bf16.mxu0 0
  %1126 = vmatmul.mubr.bf16.gmra.mxu0 %v920
  %v1127 = vpop.f32.mrf.mxu0
  %v1128 = vadd.f32 %v963, %v1127
  %v1129 = vpop.f32.mrf.mxu0
  %v1130 = vpop.f32.mrf.mxu0
  %v1131 = vadd.f32 %v963, %v1130
  %v1132 = vpop.f32.mrf.mxu0
  %1133 = vmatprep.mubr.bf16.mxu0 0
  %1134 = vmatmul.mubr.bf16.gmra.mxu0 %v921
  %v1135 = vpop.f32.mrf.mxu0
  %v1136 = vadd.f32 %v963, %v1135
  %v1137 = vpop.f32.mrf.mxu0
  %v1138 = vpop.f32.mrf.mxu0
  %v1139 = vadd.f32 %v963, %v1138
  %v1140 = vpop.f32.mrf.mxu0
  %1141 = vmatprep.mubr.bf16.mxu0 0
  %1142 = vmatmul.mubr.bf16.gmra.mxu0 %v922
  %v1143 = vpop.f32.mrf.mxu0
  %v1144 = vadd.f32 %v963, %v1143
  %v1145 = vpop.f32.mrf.mxu0
  %v1146 = vpop.f32.mrf.mxu0
  %v1147 = vadd.f32 %v963, %v1146
  %v1148 = vpop.f32.mrf.mxu0
  %1149 = vmatprep.mubr.bf16.mxu0 0
  %1150 = vmatmul.mubr.bf16.gmra.mxu0 %v923
  %v1151 = vpop.f32.mrf.mxu0
  %v1152 = vadd.f32 %v963, %v1151
  %v1153 = vpop.f32.mrf.mxu0
  %v1154 = vpop.f32.mrf.mxu0
  %v1155 = vadd.f32 %v963, %v1154
  %v1156 = vpop.f32.mrf.mxu0
  %1157 = vmatprep.mubr.bf16.mxu0 0
  %1158 = vmatmul.mubr.bf16.gmra.mxu0 %v924
  %v1159 = vpop.f32.mrf.mxu0
  %v1160 = vadd.f32 %v963, %v1159
  %v1161 = vpop.f32.mrf.mxu0
  %v1162 = vpop.f32.mrf.mxu0
  %v1163 = vadd.f32 %v963, %v1162
  %v1164 = vpop.f32.mrf.mxu0
  %1165 = vmatprep.mubr.bf16.mxu0 0
  %1166 = vmatmul.mubr.bf16.gmra.mxu0 %v925
  %v1167 = vpop.f32.mrf.mxu0
  %v1168 = vadd.f32 %v963, %v1167
  %v1169 = vpop.f32.mrf.mxu0
  %v1170 = vpop.f32.mrf.mxu0
  %v1171 = vadd.f32 %v963, %v1170
  %v1172 = vpop.f32.mrf.mxu0
  %1173 = vmatprep.mubr.bf16.mxu0 0
  %1174 = vmatmul.mubr.bf16.gmra.mxu0 %v926
  %v1175 = vpop.f32.mrf.mxu0
  %v1176 = vadd.f32 %v963, %v1175
  %v1177 = vpop.f32.mrf.mxu0
  %v1178 = vpop.f32.mrf.mxu0
  %v1179 = vadd.f32 %v963, %v1178
  %v1180 = vpop.f32.mrf.mxu0
  %1181 = vmatprep.mubr.bf16.mxu0 0
  %1182 = vmatmul.mubr.bf16.gmra.mxu0 %v927
  %v1183 = vpop.f32.mrf.mxu0
  %v1184 = vadd.f32 %v963, %v1183
  %v1185 = vpop.f32.mrf.mxu0
  %v1186 = vpop.f32.mrf.mxu0
  %v1187 = vadd.f32 %v963, %v1186
  %v1188 = vpop.f32.mrf.mxu0
  %1189 = vmatprep.mubr.bf16.mxu0 0
  %1190 = vmatmul.mubr.bf16.gmra.mxu0 %v928
  %v1191 = vpop.f32.mrf.mxu0
  %v1192 = vadd.f32 %v963, %v1191
  %v1193 = vpop.f32.mrf.mxu0
  %v1194 = vpop.f32.mrf.mxu0
  %v1195 = vadd.f32 %v963, %v1194
  %v1196 = vpop.f32.mrf.mxu0
  %1197 = vmatprep.mubr.bf16.mxu0 0
  %1198 = vmatmul.mubr.bf16.gmra.mxu0 %v929
  %v1199 = vpop.f32.mrf.mxu0
  %v1200 = vadd.f32 %v963, %v1199
  %v1201 = vpop.f32.mrf.mxu0
  %v1202 = vpop.f32.mrf.mxu0
  %v1203 = vadd.f32 %v963, %v1202
  %v1204 = vpop.f32.mrf.mxu0
  %1205 = vmatprep.mubr.bf16.mxu0 0
  %1206 = vmatmul.mubr.bf16.gmra.mxu0 %v930
  %v1207 = vpop.f32.mrf.mxu0
  %v1208 = vadd.f32 %v963, %v1207
  %v1209 = vpop.f32.mrf.mxu0
  %v1210 = vpop.f32.mrf.mxu0
  %v1211 = vadd.f32 %v963, %v1210
  %v1212 = vpop.f32.mrf.mxu0
  %1213 = vmatprep.mubr.bf16.mxu0 0
  %1214 = vmatmul.mubr.bf16.gmra.mxu0 %v931
  %v1215 = vpop.f32.mrf.mxu0
  %v1216 = vadd.f32 %v963, %v1215
  %v1217 = vpop.f32.mrf.mxu0
  %v1218 = vpop.f32.mrf.mxu0
  %v1219 = vadd.f32 %v963, %v1218
  %v1220 = vpop.f32.mrf.mxu0
  %1221 = vmatprep.mubr.bf16.mxu0 0
  %1222 = vmatmul.mubr.bf16.gmra.mxu0 %v932
  %v1223 = vpop.f32.mrf.mxu0
  %v1224 = vadd.f32 %v963, %v1223
  %v1225 = vpop.f32.mrf.mxu0
  %v1226 = vpop.f32.mrf.mxu0
  %v1227 = vadd.f32 %v963, %v1226
  %v1228 = vpop.f32.mrf.mxu0
  %1229 = vmatprep.mubr.bf16.mxu0 0
  %1230 = vmatmul.mubr.bf16.gmra.mxu0 %v933
  %v1231 = vpop.f32.mrf.mxu0
  %v1232 = vadd.f32 %v963, %v1231
  %v1233 = vpop.f32.mrf.mxu0
  %v1234 = vpop.f32.mrf.mxu0
  %v1235 = vadd.f32 %v963, %v1234
  %v1236 = vpop.f32.mrf.mxu0
  %1237 = vmatprep.mubr.bf16.mxu0 0
  %1238 = vmatmul.mubr.bf16.gmra.mxu0 %v934
  %v1239 = vpop.f32.mrf.mxu0
  %v1240 = vadd.f32 %v963, %v1239
  %v1241 = vpop.f32.mrf.mxu0
  %v1242 = vpop.f32.mrf.mxu0
  %v1243 = vadd.f32 %v963, %v1242
  %v1244 = vpop.f32.mrf.mxu0
  %1245 = vmatprep.mubr.bf16.mxu0 0
  %1246 = vmatmul.mubr.bf16.gmra.mxu0 %v935
  %v1247 = vpop.f32.mrf.mxu0
  %v1248 = vadd.f32 %v963, %v1247
  %v1249 = vpop.f32.mrf.mxu0
  %v1250 = vpop.f32.mrf.mxu0
  %v1251 = vadd.f32 %v963, %v1250
  %v1252 = vpop.f32.mrf.mxu0
  %1253 = vmatprep.mubr.bf16.mxu0 0
  %1254 = vmatmul.mubr.bf16.gmra.mxu0 %v936
  %v1255 = vpop.f32.mrf.mxu0
  %v1256 = vadd.f32 %v963, %v1255
  %v1257 = vpop.f32.mrf.mxu0
  %v1258 = vpop.f32.mrf.mxu0
  %v1259 = vadd.f32 %v963, %v1258
  %v1260 = vpop.f32.mrf.mxu0
  %1261 = vmatprep.mubr.bf16.mxu0 0
  %1262 = vmatmul.mubr.bf16.gmra.mxu0 %v937
  %v1263 = vpop.f32.mrf.mxu0
  %v1264 = vadd.f32 %v963, %v1263
  %v1265 = vpop.f32.mrf.mxu0
  %v1266 = vpop.f32.mrf.mxu0
  %v1267 = vadd.f32 %v963, %v1266
  %v1268 = vpop.f32.mrf.mxu0
  %1269 = vmatprep.mubr.bf16.mxu0 0
  %1270 = vmatmul.mubr.bf16.gmra.mxu0 %v938
  %v1271 = vpop.f32.mrf.mxu0
  %v1272 = vadd.f32 %v963, %v1271
  %v1273 = vpop.f32.mrf.mxu0
  %v1274 = vpop.f32.mrf.mxu0
  %v1275 = vadd.f32 %v963, %v1274
  %v1276 = vpop.f32.mrf.mxu0
  %1277 = vmatprep.mubr.bf16.mxu0 0
  %1278 = vmatmul.mubr.bf16.gmra.mxu0 %v939
  %v1279 = vpop.f32.mrf.mxu0
  %v1280 = vadd.f32 %v963, %v1279
  %v1281 = vpop.f32.mrf.mxu0
  %v1282 = vpop.f32.mrf.mxu0
  %v1283 = vadd.f32 %v963, %v1282
  %v1284 = vpop.f32.mrf.mxu0
  %1285 = vmatprep.mubr.bf16.mxu0 0
  %1286 = vmatmul.mubr.bf16.gmra.mxu0 %v940
  %v1287 = vpop.f32.mrf.mxu0
  %v1288 = vadd.f32 %v963, %v1287
  %v1289 = vpop.f32.mrf.mxu0
  %v1290 = vpop.f32.mrf.mxu0
  %v1291 = vadd.f32 %v963, %v1290
  %v1292 = vpop.f32.mrf.mxu0
  %1293 = vmatprep.mubr.bf16.mxu0 0
  %1294 = vmatmul.mubr.bf16.gmra.mxu0 %v941
  %v1295 = vpop.f32.mrf.mxu0
  %v1296 = vadd.f32 %v963, %v1295
  %v1297 = vpop.f32.mrf.mxu0
  %v1298 = vpop.f32.mrf.mxu0
  %v1299 = vadd.f32 %v963, %v1298
  %v1300 = vpop.f32.mrf.mxu0
  %1301 = vdwg.mxu0
  %1302 = vmax.xlane.f32.xlu0 %v1048
  %v1303 = vpop.xlane.xlu0 %1302
  %1304 = vmax.xlane.f32.xlu0 %v1051
  %v1305 = vpop.xlane.xlu0 %1304
  %1306 = vmax.xlane.f32.xlu0 %v1056
  %v1307 = vpop.xlane.xlu0 %1306
  %1308 = vmax.xlane.f32.xlu0 %v1059
  %v1309 = vpop.xlane.xlu0 %1308
  %1310 = vmax.xlane.f32.xlu0 %v1064
  %v1311 = vpop.xlane.xlu0 %1310
  %1312 = vmax.xlane.f32.xlu0 %v1067
  %v1313 = vpop.xlane.xlu0 %1312
  %1314 = vmax.xlane.f32.xlu0 %v1072
  %v1315 = vpop.xlane.xlu0 %1314
  %1316 = vmax.xlane.f32.xlu0 %v1075
  %v1317 = vpop.xlane.xlu0 %1316
  %1318 = vmax.xlane.f32.xlu0 %v1080
  %v1319 = vpop.xlane.xlu0 %1318
  %1320 = vmax.xlane.f32.xlu0 %v1083
  %v1321 = vpop.xlane.xlu0 %1320
  %1322 = vmax.xlane.f32.xlu0 %v1088
  %v1323 = vpop.xlane.xlu0 %1322
  %1324 = vmax.xlane.f32.xlu0 %v1091
  %v1325 = vpop.xlane.xlu0 %1324
  %1326 = vmax.xlane.f32.xlu0 %v1096
  %v1327 = vpop.xlane.xlu0 %1326
  %1328 = vmax.xlane.f32.xlu0 %v1099
  %v1329 = vpop.xlane.xlu0 %1328
  %1330 = vmax.xlane.f32.xlu0 %v1104
  %v1331 = vpop.xlane.xlu0 %1330
  %1332 = vmax.xlane.f32.xlu0 %v1107
  %v1333 = vpop.xlane.xlu0 %1332
  %1334 = vmax.xlane.f32.xlu0 %v1112
  %v1335 = vpop.xlane.xlu0 %1334
  %1336 = vmax.xlane.f32.xlu0 %v1115
  %v1337 = vpop.xlane.xlu0 %1336
  %1338 = vmax.xlane.f32.xlu0 %v1120
  %v1339 = vpop.xlane.xlu0 %1338
  %1340 = vmax.xlane.f32.xlu0 %v1123
  %v1341 = vpop.xlane.xlu0 %1340
  %1342 = vmax.xlane.f32.xlu0 %v1128
  %v1343 = vpop.xlane.xlu0 %1342
  %1344 = vmax.xlane.f32.xlu0 %v1131
  %v1345 = vpop.xlane.xlu0 %1344
  %1346 = vmax.xlane.f32.xlu0 %v1136
  %v1347 = vpop.xlane.xlu0 %1346
  %1348 = vmax.xlane.f32.xlu0 %v1139
  %v1349 = vpop.xlane.xlu0 %1348
  %1350 = vmax.xlane.f32.xlu0 %v1144
  %v1351 = vpop.xlane.xlu0 %1350
  %1352 = vmax.xlane.f32.xlu0 %v1147
  %v1353 = vpop.xlane.xlu0 %1352
  %1354 = vmax.xlane.f32.xlu0 %v1152
  %v1355 = vpop.xlane.xlu0 %1354
  %1356 = vmax.xlane.f32.xlu0 %v1155
  %v1357 = vpop.xlane.xlu0 %1356
  %1358 = vmax.xlane.f32.xlu0 %v1160
  %v1359 = vpop.xlane.xlu0 %1358
  %1360 = vmax.xlane.f32.xlu0 %v1163
  %v1361 = vpop.xlane.xlu0 %1360
  %1362 = vmax.xlane.f32.xlu0 %v1168
  %v1363 = vpop.xlane.xlu0 %1362
  %1364 = vmax.xlane.f32.xlu0 %v1171
  %v1365 = vpop.xlane.xlu0 %1364
  %1366 = vmax.xlane.f32.xlu0 %v1176
  %v1367 = vpop.xlane.xlu0 %1366
  %1368 = vmax.xlane.f32.xlu0 %v1179
  %v1369 = vpop.xlane.xlu0 %1368
  %1370 = vmax.xlane.f32.xlu0 %v1184
  %v1371 = vpop.xlane.xlu0 %1370
  %1372 = vmax.xlane.f32.xlu0 %v1187
  %v1373 = vpop.xlane.xlu0 %1372
  %1374 = vmax.xlane.f32.xlu0 %v1192
  %v1375 = vpop.xlane.xlu0 %1374
  %1376 = vmax.xlane.f32.xlu0 %v1195
  %v1377 = vpop.xlane.xlu0 %1376
  %1378 = vmax.xlane.f32.xlu0 %v1200
  %v1379 = vpop.xlane.xlu0 %1378
  %1380 = vmax.xlane.f32.xlu0 %v1203
  %v1381 = vpop.xlane.xlu0 %1380
  %1382 = vmax.xlane.f32.xlu0 %v1208
  %v1383 = vpop.xlane.xlu0 %1382
  %1384 = vmax.xlane.f32.xlu0 %v1211
  %v1385 = vpop.xlane.xlu0 %1384
  %1386 = vmax.xlane.f32.xlu0 %v1216
  %v1387 = vpop.xlane.xlu0 %1386
  %1388 = vmax.xlane.f32.xlu0 %v1219
  %v1389 = vpop.xlane.xlu0 %1388
  %1390 = vmax.xlane.f32.xlu0 %v1224
  %v1391 = vpop.xlane.xlu0 %1390
  %1392 = vmax.xlane.f32.xlu0 %v1227
  %v1393 = vpop.xlane.xlu0 %1392
  %1394 = vmax.xlane.f32.xlu0 %v1232
  %v1395 = vpop.xlane.xlu0 %1394
  %1396 = vmax.xlane.f32.xlu0 %v1235
  %v1397 = vpop.xlane.xlu0 %1396
  %1398 = vmax.xlane.f32.xlu0 %v1240
  %v1399 = vpop.xlane.xlu0 %1398
  %1400 = vmax.xlane.f32.xlu0 %v1243
  %v1401 = vpop.xlane.xlu0 %1400
  %1402 = vmax.xlane.f32.xlu0 %v1248
  %v1403 = vpop.xlane.xlu0 %1402
  %1404 = vmax.xlane.f32.xlu0 %v1251
  %v1405 = vpop.xlane.xlu0 %1404
  %1406 = vmax.xlane.f32.xlu0 %v1256
  %v1407 = vpop.xlane.xlu0 %1406
  %1408 = vmax.xlane.f32.xlu0 %v1259
  %v1409 = vpop.xlane.xlu0 %1408
  %1410 = vmax.xlane.f32.xlu0 %v1264
  %v1411 = vpop.xlane.xlu0 %1410
  %1412 = vmax.xlane.f32.xlu0 %v1267
  %v1413 = vpop.xlane.xlu0 %1412
  %1414 = vmax.xlane.f32.xlu0 %v1272
  %v1415 = vpop.xlane.xlu0 %1414
  %1416 = vmax.xlane.f32.xlu0 %v1275
  %v1417 = vpop.xlane.xlu0 %1416
  %1418 = vmax.xlane.f32.xlu0 %v1280
  %v1419 = vpop.xlane.xlu0 %1418
  %1420 = vmax.xlane.f32.xlu0 %v1283
  %v1421 = vpop.xlane.xlu0 %1420
  %1422 = vmax.xlane.f32.xlu0 %v1288
  %v1423 = vpop.xlane.xlu0 %1422
  %1424 = vmax.xlane.f32.xlu0 %v1291
  %v1425 = vpop.xlane.xlu0 %1424
  %1426 = vmax.xlane.f32.xlu0 %v1296
  %v1427 = vpop.xlane.xlu0 %1426
  %1428 = vmax.xlane.f32.xlu0 %v1299
  %v1429 = vpop.xlane.xlu0 %1428
  %v1430 = vsub.f32 %v1048, %v1303
  %v1431 = vsub.f32 %v1051, %v1305
  %v1432 = vsub.f32 %v1056, %v1307
  %v1433 = vsub.f32 %v1059, %v1309
  %v1434 = vsub.f32 %v1064, %v1311
  %v1435 = vsub.f32 %v1067, %v1313
  %v1436 = vsub.f32 %v1072, %v1315
  %v1437 = vsub.f32 %v1075, %v1317
  %v1438 = vsub.f32 %v1080, %v1319
  %v1439 = vsub.f32 %v1083, %v1321
  %v1440 = vsub.f32 %v1088, %v1323
  %v1441 = vsub.f32 %v1091, %v1325
  %v1442 = vsub.f32 %v1096, %v1327
  %v1443 = vsub.f32 %v1099, %v1329
  %v1444 = vsub.f32 %v1104, %v1331
  %v1445 = vsub.f32 %v1107, %v1333
  %v1446 = vsub.f32 %v1112, %v1335
  %v1447 = vsub.f32 %v1115, %v1337
  %v1448 = vsub.f32 %v1120, %v1339
  %v1449 = vsub.f32 %v1123, %v1341
  %v1450 = vsub.f32 %v1128, %v1343
  %v1451 = vsub.f32 %v1131, %v1345
  %v1452 = vsub.f32 %v1136, %v1347
  %v1453 = vsub.f32 %v1139, %v1349
  %v1454 = vsub.f32 %v1144, %v1351
  %v1455 = vsub.f32 %v1147, %v1353
  %v1456 = vsub.f32 %v1152, %v1355
  %v1457 = vsub.f32 %v1155, %v1357
  %v1458 = vsub.f32 %v1160, %v1359
  %v1459 = vsub.f32 %v1163, %v1361
  %v1460 = vsub.f32 %v1168, %v1363
  %v1461 = vsub.f32 %v1171, %v1365
  %v1462 = vsub.f32 %v1176, %v1367
  %v1463 = vsub.f32 %v1179, %v1369
  %v1464 = vsub.f32 %v1184, %v1371
  %v1465 = vsub.f32 %v1187, %v1373
  %v1466 = vsub.f32 %v1192, %v1375
  %v1467 = vsub.f32 %v1195, %v1377
  %v1468 = vsub.f32 %v1200, %v1379
  %v1469 = vsub.f32 %v1203, %v1381
  %v1470 = vsub.f32 %v1208, %v1383
  %v1471 = vsub.f32 %v1211, %v1385
  %v1472 = vsub.f32 %v1216, %v1387
  %v1473 = vsub.f32 %v1219, %v1389
  %v1474 = vsub.f32 %v1224, %v1391
  %v1475 = vsub.f32 %v1227, %v1393
  %v1476 = vsub.f32 %v1232, %v1395
  %v1477 = vsub.f32 %v1235, %v1397
  %v1478 = vsub.f32 %v1240, %v1399
  %v1479 = vsub.f32 %v1243, %v1401
  %v1480 = vsub.f32 %v1248, %v1403
  %v1481 = vsub.f32 %v1251, %v1405
  %v1482 = vsub.f32 %v1256, %v1407
  %v1483 = vsub.f32 %v1259, %v1409
  %v1484 = vsub.f32 %v1264, %v1411
  %v1485 = vsub.f32 %v1267, %v1413
  %v1486 = vsub.f32 %v1272, %v1415
  %v1487 = vsub.f32 %v1275, %v1417
  %v1488 = vsub.f32 %v1280, %v1419
  %v1489 = vsub.f32 %v1283, %v1421
  %v1490 = vsub.f32 %v1288, %v1423
  %v1491 = vsub.f32 %v1291, %v1425
  %v1492 = vsub.f32 %v1296, %v1427
  %v1493 = vsub.f32 %v1299, %v1429
  %v1494 = vmul.f32 %v1430, 1.442695
  %v1495 = vpow.pop %v1494
  %v1496 = vmul.f32 %v1431, 1.442695
  %v1497 = vpow.pop %v1496
  %v1498 = vmul.f32 %v1432, 1.442695
  %v1499 = vpow.pop %v1498
  %v1500 = vmul.f32 %v1433, 1.442695
  %v1501 = vpow.pop %v1500
  %v1502 = vmul.f32 %v1434, 1.442695
  %v1503 = vpow.pop %v1502
  %v1504 = vmul.f32 %v1435, 1.442695
  %v1505 = vpow.pop %v1504
  %v1506 = vmul.f32 %v1436, 1.442695
  %v1507 = vpow.pop %v1506
  %v1508 = vmul.f32 %v1437, 1.442695
  %v1509 = vpow.pop %v1508
  %v1510 = vmul.f32 %v1438, 1.442695
  %v1511 = vpow.pop %v1510
  %v1512 = vmul.f32 %v1439, 1.442695
  %v1513 = vpow.pop %v1512
  %v1514 = vmul.f32 %v1440, 1.442695
  %v1515 = vpow.pop %v1514
  %v1516 = vmul.f32 %v1441, 1.442695
  %v1517 = vpow.pop %v1516
  %v1518 = vmul.f32 %v1442, 1.442695
  %v1519 = vpow.pop %v1518
  %v1520 = vmul.f32 %v1443, 1.442695
  %v1521 = vpow.pop %v1520
  %v1522 = vmul.f32 %v1444, 1.442695
  %v1523 = vpow.pop %v1522
  %v1524 = vmul.f32 %v1445, 1.442695
  %v1525 = vpow.pop %v1524
  %v1526 = vmul.f32 %v1446, 1.442695
  %v1527 = vpow.pop %v1526
  %v1528 = vmul.f32 %v1447, 1.442695
  %v1529 = vpow.pop %v1528
  %v1530 = vmul.f32 %v1448, 1.442695
  %v1531 = vpow.pop %v1530
  %v1532 = vmul.f32 %v1449, 1.442695
  %v1533 = vpow.pop %v1532
  %v1534 = vmul.f32 %v1450, 1.442695
  %v1535 = vpow.pop %v1534
  %v1536 = vmul.f32 %v1451, 1.442695
  %v1537 = vpow.pop %v1536
  %v1538 = vmul.f32 %v1452, 1.442695
  %v1539 = vpow.pop %v1538
  %v1540 = vmul.f32 %v1453, 1.442695
  %v1541 = vpow.pop %v1540
  %v1542 = vmul.f32 %v1454, 1.442695
  %v1543 = vpow.pop %v1542
  %v1544 = vmul.f32 %v1455, 1.442695
  %v1545 = vpow.pop %v1544
  %v1546 = vmul.f32 %v1456, 1.442695
  %v1547 = vpow.pop %v1546
  %v1548 = vmul.f32 %v1457, 1.442695
  %v1549 = vpow.pop %v1548
  %v1550 = vmul.f32 %v1458, 1.442695
  %v1551 = vpow.pop %v1550
  %v1552 = vmul.f32 %v1459, 1.442695
  %v1553 = vpow.pop %v1552
  %v1554 = vmul.f32 %v1460, 1.442695
  %v1555 = vpow.pop %v1554
  %v1556 = vmul.f32 %v1461, 1.442695
  %v1557 = vpow.pop %v1556
  %v1558 = vmul.f32 %v1462, 1.442695
  %v1559 = vpow.pop %v1558
  %v1560 = vmul.f32 %v1463, 1.442695
  %v1561 = vpow.pop %v1560
  %v1562 = vmul.f32 %v1464, 1.442695
  %v1563 = vpow.pop %v1562
  %v1564 = vmul.f32 %v1465, 1.442695
  %v1565 = vpow.pop %v1564
  %v1566 = vmul.f32 %v1466, 1.442695
  %v1567 = vpow.pop %v1566
  %v1568 = vmul.f32 %v1467, 1.442695
  %v1569 = vpow.pop %v1568
  %v1570 = vmul.f32 %v1468, 1.442695
  %v1571 = vpow.pop %v1570
  %v1572 = vmul.f32 %v1469, 1.442695
  %v1573 = vpow.pop %v1572
  %v1574 = vmul.f32 %v1470, 1.442695
  %v1575 = vpow.pop %v1574
  %v1576 = vmul.f32 %v1471, 1.442695
  %v1577 = vpow.pop %v1576
  %v1578 = vmul.f32 %v1472, 1.442695
  %v1579 = vpow.pop %v1578
  %v1580 = vmul.f32 %v1473, 1.442695
  %v1581 = vpow.pop %v1580
  %v1582 = vmul.f32 %v1474, 1.442695
  %v1583 = vpow.pop %v1582
  %v1584 = vmul.f32 %v1475, 1.442695
  %v1585 = vpow.pop %v1584
  %v1586 = vmul.f32 %v1476, 1.442695
  %v1587 = vpow.pop %v1586
  %v1588 = vmul.f32 %v1477, 1.442695
  %v1589 = vpow.pop %v1588
  %v1590 = vmul.f32 %v1478, 1.442695
  %v1591 = vpow.pop %v1590
  %v1592 = vmul.f32 %v1479, 1.442695
  %v1593 = vpow.pop %v1592
  %v1594 = vmul.f32 %v1480, 1.442695
  %v1595 = vpow.pop %v1594
  %v1596 = vmul.f32 %v1481, 1.442695
  %v1597 = vpow.pop %v1596
  %v1598 = vmul.f32 %v1482, 1.442695
  %v1599 = vpow.pop %v1598
  %v1600 = vmul.f32 %v1483, 1.442695
  %v1601 = vpow.pop %v1600
  %v1602 = vmul.f32 %v1484, 1.442695
  %v1603 = vpow.pop %v1602
  %v1604 = vmul.f32 %v1485, 1.442695
  %v1605 = vpow.pop %v1604
  %v1606 = vmul.f32 %v1486, 1.442695
  %v1607 = vpow.pop %v1606
  %v1608 = vmul.f32 %v1487, 1.442695
  %v1609 = vpow.pop %v1608
  %v1610 = vmul.f32 %v1488, 1.442695
  %v1611 = vpow.pop %v1610
  %v1612 = vmul.f32 %v1489, 1.442695
  %v1613 = vpow.pop %v1612
  %v1614 = vmul.f32 %v1490, 1.442695
  %v1615 = vpow.pop %v1614
  %v1616 = vmul.f32 %v1491, 1.442695
  %v1617 = vpow.pop %v1616
  %v1618 = vmul.f32 %v1492, 1.442695
  %v1619 = vpow.pop %v1618
  %v1620 = vmul.f32 %v1493, 1.442695
  %v1621 = vpow.pop %v1620
  %1622 = vadd.xlane.f32.xlu0 %v1495
  %v1623 = vpop.xlane.xlu0 %1622
  %1624 = vadd.xlane.f32.xlu0 %v1497
  %v1625 = vpop.xlane.xlu0 %1624
  %1626 = vadd.xlane.f32.xlu0 %v1499
  %v1627 = vpop.xlane.xlu0 %1626
  %1628 = vadd.xlane.f32.xlu0 %v1501
  %v1629 = vpop.xlane.xlu0 %1628
  %1630 = vadd.xlane.f32.xlu0 %v1503
  %v1631 = vpop.xlane.xlu0 %1630
  %1632 = vadd.xlane.f32.xlu0 %v1505
  %v1633 = vpop.xlane.xlu0 %1632
  %1634 = vadd.xlane.f32.xlu0 %v1507
  %v1635 = vpop.xlane.xlu0 %1634
  %1636 = vadd.xlane.f32.xlu0 %v1509
  %v1637 = vpop.xlane.xlu0 %1636
  %1638 = vadd.xlane.f32.xlu0 %v1511
  %v1639 = vpop.xlane.xlu0 %1638
  %1640 = vadd.xlane.f32.xlu0 %v1513
  %v1641 = vpop.xlane.xlu0 %1640
  %1642 = vadd.xlane.f32.xlu0 %v1515
  %v1643 = vpop.xlane.xlu0 %1642
  %1644 = vadd.xlane.f32.xlu0 %v1517
  %v1645 = vpop.xlane.xlu0 %1644
  %1646 = vadd.xlane.f32.xlu0 %v1519
  %v1647 = vpop.xlane.xlu0 %1646
  %1648 = vadd.xlane.f32.xlu0 %v1521
  %v1649 = vpop.xlane.xlu0 %1648
  %1650 = vadd.xlane.f32.xlu0 %v1523
  %v1651 = vpop.xlane.xlu0 %1650
  %1652 = vadd.xlane.f32.xlu0 %v1525
  %v1653 = vpop.xlane.xlu0 %1652
  %1654 = vadd.xlane.f32.xlu0 %v1527
  %v1655 = vpop.xlane.xlu0 %1654
  %1656 = vadd.xlane.f32.xlu0 %v1529
  %v1657 = vpop.xlane.xlu0 %1656
  %1658 = vadd.xlane.f32.xlu0 %v1531
  %v1659 = vpop.xlane.xlu0 %1658
  %1660 = vadd.xlane.f32.xlu0 %v1533
  %v1661 = vpop.xlane.xlu0 %1660
  %1662 = vadd.xlane.f32.xlu0 %v1535
  %v1663 = vpop.xlane.xlu0 %1662
  %1664 = vadd.xlane.f32.xlu0 %v1537
  %v1665 = vpop.xlane.xlu0 %1664
  %1666 = vadd.xlane.f32.xlu0 %v1539
  %v1667 = vpop.xlane.xlu0 %1666
  %1668 = vadd.xlane.f32.xlu0 %v1541
  %v1669 = vpop.xlane.xlu0 %1668
  %1670 = vadd.xlane.f32.xlu0 %v1543
  %v1671 = vpop.xlane.xlu0 %1670
  %1672 = vadd.xlane.f32.xlu0 %v1545
  %v1673 = vpop.xlane.xlu0 %1672
  %1674 = vadd.xlane.f32.xlu0 %v1547
  %v1675 = vpop.xlane.xlu0 %1674
  %1676 = vadd.xlane.f32.xlu0 %v1549
  %v1677 = vpop.xlane.xlu0 %1676
  %1678 = vadd.xlane.f32.xlu0 %v1551
  %v1679 = vpop.xlane.xlu0 %1678
  %1680 = vadd.xlane.f32.xlu0 %v1553
  %v1681 = vpop.xlane.xlu0 %1680
  %1682 = vadd.xlane.f32.xlu0 %v1555
  %v1683 = vpop.xlane.xlu0 %1682
  %1684 = vadd.xlane.f32.xlu0 %v1557
  %v1685 = vpop.xlane.xlu0 %1684
  %1686 = vadd.xlane.f32.xlu0 %v1559
  %v1687 = vpop.xlane.xlu0 %1686
  %1688 = vadd.xlane.f32.xlu0 %v1561
  %v1689 = vpop.xlane.xlu0 %1688
  %1690 = vadd.xlane.f32.xlu0 %v1563
  %v1691 = vpop.xlane.xlu0 %1690
  %1692 = vadd.xlane.f32.xlu0 %v1565
  %v1693 = vpop.xlane.xlu0 %1692
  %1694 = vadd.xlane.f32.xlu0 %v1567
  %v1695 = vpop.xlane.xlu0 %1694
  %1696 = vadd.xlane.f32.xlu0 %v1569
  %v1697 = vpop.xlane.xlu0 %1696
  %1698 = vadd.xlane.f32.xlu0 %v1571
  %v1699 = vpop.xlane.xlu0 %1698
  %1700 = vadd.xlane.f32.xlu0 %v1573
  %v1701 = vpop.xlane.xlu0 %1700
  %1702 = vadd.xlane.f32.xlu0 %v1575
  %v1703 = vpop.xlane.xlu0 %1702
  %1704 = vadd.xlane.f32.xlu0 %v1577
  %v1705 = vpop.xlane.xlu0 %1704
  %1706 = vadd.xlane.f32.xlu0 %v1579
  %v1707 = vpop.xlane.xlu0 %1706
  %1708 = vadd.xlane.f32.xlu0 %v1581
  %v1709 = vpop.xlane.xlu0 %1708
  %1710 = vadd.xlane.f32.xlu0 %v1583
  %v1711 = vpop.xlane.xlu0 %1710
  %1712 = vadd.xlane.f32.xlu0 %v1585
  %v1713 = vpop.xlane.xlu0 %1712
  %1714 = vadd.xlane.f32.xlu0 %v1587
  %v1715 = vpop.xlane.xlu0 %1714
  %1716 = vadd.xlane.f32.xlu0 %v1589
  %v1717 = vpop.xlane.xlu0 %1716
  %1718 = vadd.xlane.f32.xlu0 %v1591
  %v1719 = vpop.xlane.xlu0 %1718
  %1720 = vadd.xlane.f32.xlu0 %v1593
  %v1721 = vpop.xlane.xlu0 %1720
  %1722 = vadd.xlane.f32.xlu0 %v1595
  %v1723 = vpop.xlane.xlu0 %1722
  %1724 = vadd.xlane.f32.xlu0 %v1597
  %v1725 = vpop.xlane.xlu0 %1724
  %1726 = vadd.xlane.f32.xlu0 %v1599
  %v1727 = vpop.xlane.xlu0 %1726
  %1728 = vadd.xlane.f32.xlu0 %v1601
  %v1729 = vpop.xlane.xlu0 %1728
  %1730 = vadd.xlane.f32.xlu0 %v1603
  %v1731 = vpop.xlane.xlu0 %1730
  %1732 = vadd.xlane.f32.xlu0 %v1605
  %v1733 = vpop.xlane.xlu0 %1732
  %1734 = vadd.xlane.f32.xlu0 %v1607
  %v1735 = vpop.xlane.xlu0 %1734
  %1736 = vadd.xlane.f32.xlu0 %v1609
  %v1737 = vpop.xlane.xlu0 %1736
  %1738 = vadd.xlane.f32.xlu0 %v1611
  %v1739 = vpop.xlane.xlu0 %1738
  %1740 = vadd.xlane.f32.xlu0 %v1613
  %v1741 = vpop.xlane.xlu0 %1740
  %1742 = vadd.xlane.f32.xlu0 %v1615
  %v1743 = vpop.xlane.xlu0 %1742
  %1744 = vadd.xlane.f32.xlu0 %v1617
  %v1745 = vpop.xlane.xlu0 %1744
  %1746 = vadd.xlane.f32.xlu0 %v1619
  %v1747 = vpop.xlane.xlu0 %1746
  %1748 = vadd.xlane.f32.xlu0 %v1621
  %v1749 = vpop.xlane.xlu0 %1748
  %v1750 = vrcp.pop %v1623
  %v1751 = vrcp.pop %v1625
  %v1752 = vrcp.pop %v1627
  %v1753 = vrcp.pop %v1629
  %v1754 = vrcp.pop %v1631
  %v1755 = vrcp.pop %v1633
  %v1756 = vrcp.pop %v1635
  %v1757 = vrcp.pop %v1637
  %v1758 = vrcp.pop %v1639
  %v1759 = vrcp.pop %v1641
  %v1760 = vrcp.pop %v1643
  %v1761 = vrcp.pop %v1645
  %v1762 = vrcp.pop %v1647
  %v1763 = vrcp.pop %v1649
  %v1764 = vrcp.pop %v1651
  %v1765 = vrcp.pop %v1653
  %v1766 = vrcp.pop %v1655
  %v1767 = vrcp.pop %v1657
  %v1768 = vrcp.pop %v1659
  %v1769 = vrcp.pop %v1661
  %v1770 = vrcp.pop %v1663
  %v1771 = vrcp.pop %v1665
  %v1772 = vrcp.pop %v1667
  %v1773 = vrcp.pop %v1669
  %v1774 = vrcp.pop %v1671
  %v1775 = vrcp.pop %v1673
  %v1776 = vrcp.pop %v1675
  %v1777 = vrcp.pop %v1677
  %v1778 = vrcp.pop %v1679
  %v1779 = vrcp.pop %v1681
  %v1780 = vrcp.pop %v1683
  %v1781 = vrcp.pop %v1685
  %v1782 = vrcp.pop %v1687
  %v1783 = vrcp.pop %v1689
  %v1784 = vrcp.pop %v1691
  %v1785 = vrcp.pop %v1693
  %v1786 = vrcp.pop %v1695
  %v1787 = vrcp.pop %v1697
  %v1788 = vrcp.pop %v1699
  %v1789 = vrcp.pop %v1701
  %v1790 = vrcp.pop %v1703
  %v1791 = vrcp.pop %v1705
  %v1792 = vrcp.pop %v1707
  %v1793 = vrcp.pop %v1709
  %v1794 = vrcp.pop %v1711
  %v1795 = vrcp.pop %v1713
  %v1796 = vrcp.pop %v1715
  %v1797 = vrcp.pop %v1717
  %v1798 = vrcp.pop %v1719
  %v1799 = vrcp.pop %v1721
  %v1800 = vrcp.pop %v1723
  %v1801 = vrcp.pop %v1725
  %v1802 = vrcp.pop %v1727
  %v1803 = vrcp.pop %v1729
  %v1804 = vrcp.pop %v1731
  %v1805 = vrcp.pop %v1733
  %v1806 = vrcp.pop %v1735
  %v1807 = vrcp.pop %v1737
  %v1808 = vrcp.pop %v1739
  %v1809 = vrcp.pop %v1741
  %v1810 = vrcp.pop %v1743
  %v1811 = vrcp.pop %v1745
  %v1812 = vrcp.pop %v1747
  %v1813 = vrcp.pop %v1749
  %v1814 = vmul.f32 %v1623, %v1750
  %v1815 = vmul.f32 %v1625, %v1751
  %v1816 = vmul.f32 %v1627, %v1752
  %v1817 = vmul.f32 %v1629, %v1753
  %v1818 = vmul.f32 %v1631, %v1754
  %v1819 = vmul.f32 %v1633, %v1755
  %v1820 = vmul.f32 %v1635, %v1756
  %v1821 = vmul.f32 %v1637, %v1757
  %v1822 = vmul.f32 %v1639, %v1758
  %v1823 = vmul.f32 %v1641, %v1759
  %v1824 = vmul.f32 %v1643, %v1760
  %v1825 = vmul.f32 %v1645, %v1761
  %v1826 = vmul.f32 %v1647, %v1762
  %v1827 = vmul.f32 %v1649, %v1763
  %v1828 = vmul.f32 %v1651, %v1764
  %v1829 = vmul.f32 %v1653, %v1765
  %v1830 = vmul.f32 %v1655, %v1766
  %v1831 = vmul.f32 %v1657, %v1767
  %v1832 = vmul.f32 %v1659, %v1768
  %v1833 = vmul.f32 %v1661, %v1769
  %v1834 = vmul.f32 %v1663, %v1770
  %v1835 = vmul.f32 %v1665, %v1771
  %v1836 = vmul.f32 %v1667, %v1772
  %v1837 = vmul.f32 %v1669, %v1773
  %v1838 = vmul.f32 %v1671, %v1774
  %v1839 = vmul.f32 %v1673, %v1775
  %v1840 = vmul.f32 %v1675, %v1776
  %v1841 = vmul.f32 %v1677, %v1777
  %v1842 = vmul.f32 %v1679, %v1778
  %v1843 = vmul.f32 %v1681, %v1779
  %v1844 = vmul.f32 %v1683, %v1780
  %v1845 = vmul.f32 %v1685, %v1781
  %v1846 = vmul.f32 %v1687, %v1782
  %v1847 = vmul.f32 %v1689, %v1783
  %v1848 = vmul.f32 %v1691, %v1784
  %v1849 = vmul.f32 %v1693, %v1785
  %v1850 = vmul.f32 %v1695, %v1786
  %v1851 = vmul.f32 %v1697, %v1787
  %v1852 = vmul.f32 %v1699, %v1788
  %v1853 = vmul.f32 %v1701, %v1789
  %v1854 = vmul.f32 %v1703, %v1790
  %v1855 = vmul.f32 %v1705, %v1791
  %v1856 = vmul.f32 %v1707, %v1792
  %v1857 = vmul.f32 %v1709, %v1793
  %v1858 = vmul.f32 %v1711, %v1794
  %v1859 = vmul.f32 %v1713, %v1795
  %v1860 = vmul.f32 %v1715, %v1796
  %v1861 = vmul.f32 %v1717, %v1797
  %v1862 = vmul.f32 %v1719, %v1798
  %v1863 = vmul.f32 %v1721, %v1799
  %v1864 = vmul.f32 %v1723, %v1800
  %v1865 = vmul.f32 %v1725, %v1801
  %v1866 = vmul.f32 %v1727, %v1802
  %v1867 = vmul.f32 %v1729, %v1803
  %v1868 = vmul.f32 %v1731, %v1804
  %v1869 = vmul.f32 %v1733, %v1805
  %v1870 = vmul.f32 %v1735, %v1806
  %v1871 = vmul.f32 %v1737, %v1807
  %v1872 = vmul.f32 %v1739, %v1808
  %v1873 = vmul.f32 %v1741, %v1809
  %v1874 = vmul.f32 %v1743, %v1810
  %v1875 = vmul.f32 %v1745, %v1811
  %v1876 = vmul.f32 %v1747, %v1812
  %v1877 = vmul.f32 %v1749, %v1813
  %v1878 = vsub.f32 2.0, %v1814
  %v1879 = vsub.f32 2.0, %v1815
  %v1880 = vsub.f32 2.0, %v1816
  %v1881 = vsub.f32 2.0, %v1817
  %v1882 = vsub.f32 2.0, %v1818
  %v1883 = vsub.f32 2.0, %v1819
  %v1884 = vsub.f32 2.0, %v1820
  %v1885 = vsub.f32 2.0, %v1821
  %v1886 = vsub.f32 2.0, %v1822
  %v1887 = vsub.f32 2.0, %v1823
  %v1888 = vsub.f32 2.0, %v1824
  %v1889 = vsub.f32 2.0, %v1825
  %v1890 = vsub.f32 2.0, %v1826
  %v1891 = vsub.f32 2.0, %v1827
  %v1892 = vsub.f32 2.0, %v1828
  %v1893 = vsub.f32 2.0, %v1829
  %v1894 = vsub.f32 2.0, %v1830
  %v1895 = vsub.f32 2.0, %v1831
  %v1896 = vsub.f32 2.0, %v1832
  %v1897 = vsub.f32 2.0, %v1833
  %v1898 = vsub.f32 2.0, %v1834
  %v1899 = vsub.f32 2.0, %v1835
  %v1900 = vsub.f32 2.0, %v1836
  %v1901 = vsub.f32 2.0, %v1837
  %v1902 = vsub.f32 2.0, %v1838
  %v1903 = vsub.f32 2.0, %v1839
  %v1904 = vsub.f32 2.0, %v1840
  %v1905 = vsub.f32 2.0, %v1841
  %v1906 = vsub.f32 2.0, %v1842
  %v1907 = vsub.f32 2.0, %v1843
  %v1908 = vsub.f32 2.0, %v1844
  %v1909 = vsub.f32 2.0, %v1845
  %v1910 = vsub.f32 2.0, %v1846
  %v1911 = vsub.f32 2.0, %v1847
  %v1912 = vsub.f32 2.0, %v1848
  %v1913 = vsub.f32 2.0, %v1849
  %v1914 = vsub.f32 2.0, %v1850
  %v1915 = vsub.f32 2.0, %v1851
  %v1916 = vsub.f32 2.0, %v1852
  %v1917 = vsub.f32 2.0, %v1853
  %v1918 = vsub.f32 2.0, %v1854
  %v1919 = vsub.f32 2.0, %v1855
  %v1920 = vsub.f32 2.0, %v1856
  %v1921 = vsub.f32 2.0, %v1857
  %v1922 = vsub.f32 2.0, %v1858
  %v1923 = vsub.f32 2.0, %v1859
  %v1924 = vsub.f32 2.0, %v1860
  %v1925 = vsub.f32 2.0, %v1861
  %v1926 = vsub.f32 2.0, %v1862
  %v1927 = vsub.f32 2.0, %v1863
  %v1928 = vsub.f32 2.0, %v1864
  %v1929 = vsub.f32 2.0, %v1865
  %v1930 = vsub.f32 2.0, %v1866
  %v1931 = vsub.f32 2.0, %v1867
  %v1932 = vsub.f32 2.0, %v1868
  %v1933 = vsub.f32 2.0, %v1869
  %v1934 = vsub.f32 2.0, %v1870
  %v1935 = vsub.f32 2.0, %v1871
  %v1936 = vsub.f32 2.0, %v1872
  %v1937 = vsub.f32 2.0, %v1873
  %v1938 = vsub.f32 2.0, %v1874
  %v1939 = vsub.f32 2.0, %v1875
  %v1940 = vsub.f32 2.0, %v1876
  %v1941 = vsub.f32 2.0, %v1877
  %v1942 = vmul.f32 %v1750, %v1878
  %v1943 = vmul.f32 %v1751, %v1879
  %v1944 = vmul.f32 %v1752, %v1880
  %v1945 = vmul.f32 %v1753, %v1881
  %v1946 = vmul.f32 %v1754, %v1882
  %v1947 = vmul.f32 %v1755, %v1883
  %v1948 = vmul.f32 %v1756, %v1884
  %v1949 = vmul.f32 %v1757, %v1885
  %v1950 = vmul.f32 %v1758, %v1886
  %v1951 = vmul.f32 %v1759, %v1887
  %v1952 = vmul.f32 %v1760, %v1888
  %v1953 = vmul.f32 %v1761, %v1889
  %v1954 = vmul.f32 %v1762, %v1890
  %v1955 = vmul.f32 %v1763, %v1891
  %v1956 = vmul.f32 %v1764, %v1892
  %v1957 = vmul.f32 %v1765, %v1893
  %v1958 = vmul.f32 %v1766, %v1894
  %v1959 = vmul.f32 %v1767, %v1895
  %v1960 = vmul.f32 %v1768, %v1896
  %v1961 = vmul.f32 %v1769, %v1897
  %v1962 = vmul.f32 %v1770, %v1898
  %v1963 = vmul.f32 %v1771, %v1899
  %v1964 = vmul.f32 %v1772, %v1900
  %v1965 = vmul.f32 %v1773, %v1901
  %v1966 = vmul.f32 %v1774, %v1902
  %v1967 = vmul.f32 %v1775, %v1903
  %v1968 = vmul.f32 %v1776, %v1904
  %v1969 = vmul.f32 %v1777, %v1905
  %v1970 = vmul.f32 %v1778, %v1906
  %v1971 = vmul.f32 %v1779, %v1907
  %v1972 = vmul.f32 %v1780, %v1908
  %v1973 = vmul.f32 %v1781, %v1909
  %v1974 = vmul.f32 %v1782, %v1910
  %v1975 = vmul.f32 %v1783, %v1911
  %v1976 = vmul.f32 %v1784, %v1912
  %v1977 = vmul.f32 %v1785, %v1913
  %v1978 = vmul.f32 %v1786, %v1914
  %v1979 = vmul.f32 %v1787, %v1915
  %v1980 = vmul.f32 %v1788, %v1916
  %v1981 = vmul.f32 %v1789, %v1917
  %v1982 = vmul.f32 %v1790, %v1918
  %v1983 = vmul.f32 %v1791, %v1919
  %v1984 = vmul.f32 %v1792, %v1920
  %v1985 = vmul.f32 %v1793, %v1921
  %v1986 = vmul.f32 %v1794, %v1922
  %v1987 = vmul.f32 %v1795, %v1923
  %v1988 = vmul.f32 %v1796, %v1924
  %v1989 = vmul.f32 %v1797, %v1925
  %v1990 = vmul.f32 %v1798, %v1926
  %v1991 = vmul.f32 %v1799, %v1927
  %v1992 = vmul.f32 %v1800, %v1928
  %v1993 = vmul.f32 %v1801, %v1929
  %v1994 = vmul.f32 %v1802, %v1930
  %v1995 = vmul.f32 %v1803, %v1931
  %v1996 = vmul.f32 %v1804, %v1932
  %v1997 = vmul.f32 %v1805, %v1933
  %v1998 = vmul.f32 %v1806, %v1934
  %v1999 = vmul.f32 %v1807, %v1935
  %v2000 = vmul.f32 %v1808, %v1936
  %v2001 = vmul.f32 %v1809, %v1937
  %v2002 = vmul.f32 %v1810, %v1938
  %v2003 = vmul.f32 %v1811, %v1939
  %v2004 = vmul.f32 %v1812, %v1940
  %v2005 = vmul.f32 %v1813, %v1941
  %v2006 = vmul.f32 %v1495, %v1942
  %v2007 = vmul.f32 %v1497, %v1943
  %v2008 = vmul.f32 %v1499, %v1944
  %v2009 = vmul.f32 %v1501, %v1945
  %v2010 = vmul.f32 %v1503, %v1946
  %v2011 = vmul.f32 %v1505, %v1947
  %v2012 = vmul.f32 %v1507, %v1948
  %v2013 = vmul.f32 %v1509, %v1949
  %v2014 = vmul.f32 %v1511, %v1950
  %v2015 = vmul.f32 %v1513, %v1951
  %v2016 = vmul.f32 %v1515, %v1952
  %v2017 = vmul.f32 %v1517, %v1953
  %v2018 = vmul.f32 %v1519, %v1954
  %v2019 = vmul.f32 %v1521, %v1955
  %v2020 = vmul.f32 %v1523, %v1956
  %v2021 = vmul.f32 %v1525, %v1957
  %v2022 = vmul.f32 %v1527, %v1958
  %v2023 = vmul.f32 %v1529, %v1959
  %v2024 = vmul.f32 %v1531, %v1960
  %v2025 = vmul.f32 %v1533, %v1961
  %v2026 = vmul.f32 %v1535, %v1962
  %v2027 = vmul.f32 %v1537, %v1963
  %v2028 = vmul.f32 %v1539, %v1964
  %v2029 = vmul.f32 %v1541, %v1965
  %v2030 = vmul.f32 %v1543, %v1966
  %v2031 = vmul.f32 %v1545, %v1967
  %v2032 = vmul.f32 %v1547, %v1968
  %v2033 = vmul.f32 %v1549, %v1969
  %v2034 = vmul.f32 %v1551, %v1970
  %v2035 = vmul.f32 %v1553, %v1971
  %v2036 = vmul.f32 %v1555, %v1972
  %v2037 = vmul.f32 %v1557, %v1973
  %v2038 = vmul.f32 %v1559, %v1974
  %v2039 = vmul.f32 %v1561, %v1975
  %v2040 = vmul.f32 %v1563, %v1976
  %v2041 = vmul.f32 %v1565, %v1977
  %v2042 = vmul.f32 %v1567, %v1978
  %v2043 = vmul.f32 %v1569, %v1979
  %v2044 = vmul.f32 %v1571, %v1980
  %v2045 = vmul.f32 %v1573, %v1981
  %v2046 = vmul.f32 %v1575, %v1982
  %v2047 = vmul.f32 %v1577, %v1983
  %v2048 = vmul.f32 %v1579, %v1984
  %v2049 = vmul.f32 %v1581, %v1985
  %v2050 = vmul.f32 %v1583, %v1986
  %v2051 = vmul.f32 %v1585, %v1987
  %v2052 = vmul.f32 %v1587, %v1988
  %v2053 = vmul.f32 %v1589, %v1989
  %v2054 = vmul.f32 %v1591, %v1990
  %v2055 = vmul.f32 %v1593, %v1991
  %v2056 = vmul.f32 %v1595, %v1992
  %v2057 = vmul.f32 %v1597, %v1993
  %v2058 = vmul.f32 %v1599, %v1994
  %v2059 = vmul.f32 %v1601, %v1995
  %v2060 = vmul.f32 %v1603, %v1996
  %v2061 = vmul.f32 %v1605, %v1997
  %v2062 = vmul.f32 %v1607, %v1998
  %v2063 = vmul.f32 %v1609, %v1999
  %v2064 = vmul.f32 %v1611, %v2000
  %v2065 = vmul.f32 %v1613, %v2001
  %v2066 = vmul.f32 %v1615, %v2002
  %v2067 = vmul.f32 %v1617, %v2003
  %v2068 = vmul.f32 %v1619, %v2004
  %v2069 = vmul.f32 %v1621, %v2005
  %vm2070 = vcmask 130048
  %2071 = vst.msk [vmem:[%s5] sm:$0xff] %vm2070, %v2006
  %2072 = vst.msk [vmem:[%s5 + $0x8] sm:$0xff] %vm2070, %v2007
  %2073 = vst.msk [vmem:[%s5 + $0x10] sm:$0xff] %vm2070, %v2008
  %2074 = vst.msk [vmem:[%s5 + $0x18] sm:$0xff] %vm2070, %v2009
  %2075 = vst.msk [vmem:[%s5 + $0x20] sm:$0xff] %vm2070, %v2010
  %2076 = vst.msk [vmem:[%s5 + $0x28] sm:$0xff] %vm2070, %v2011
  %2077 = vst.msk [vmem:[%s5 + $0x30] sm:$0xff] %vm2070, %v2012
  %2078 = vst.msk [vmem:[%s5 + $0x38] sm:$0xff] %vm2070, %v2013
  %2079 = vst.msk [vmem:[%s5 + $0x40] sm:$0xff] %vm2070, %v2014
  %2080 = vst.msk [vmem:[%s5 + $0x48] sm:$0xff] %vm2070, %v2015
  %2081 = vst.msk [vmem:[%s5 + $0x50] sm:$0xff] %vm2070, %v2016
  %2082 = vst.msk [vmem:[%s5 + $0x58] sm:$0xff] %vm2070, %v2017
  %2083 = vst.msk [vmem:[%s5 + $0x60] sm:$0xff] %vm2070, %v2018
  %2084 = vst.msk [vmem:[%s5 + $0x68] sm:$0xff] %vm2070, %v2019
  %2085 = vst.msk [vmem:[%s5 + $0x70] sm:$0xff] %vm2070, %v2020
  %2086 = vst.msk [vmem:[%s5 + $0x78] sm:$0xff] %vm2070, %v2021
  %2087 = vst.msk [vmem:[%s5 + $0x80] sm:$0xff] %vm2070, %v2022
  %2088 = vst.msk [vmem:[%s5 + $0x88] sm:$0xff] %vm2070, %v2023
  %2089 = vst.msk [vmem:[%s5 + $0x90] sm:$0xff] %vm2070, %v2024
  %2090 = vst.msk [vmem:[%s5 + $0x98] sm:$0xff] %vm2070, %v2025
  %2091 = vst.msk [vmem:[%s5 + $0xa0] sm:$0xff] %vm2070, %v2026
  %2092 = vst.msk [vmem:[%s5 + $0xa8] sm:$0xff] %vm2070, %v2027
  %2093 = vst.msk [vmem:[%s5 + $0xb0] sm:$0xff] %vm2070, %v2028
  %2094 = vst.msk [vmem:[%s5 + $0xb8] sm:$0xff] %vm2070, %v2029
  %2095 = vst.msk [vmem:[%s5 + $0xc0] sm:$0xff] %vm2070, %v2030
  %2096 = vst.msk [vmem:[%s5 + $0xc8] sm:$0xff] %vm2070, %v2031
  %2097 = vst.msk [vmem:[%s5 + $0xd0] sm:$0xff] %vm2070, %v2032
  %2098 = vst.msk [vmem:[%s5 + $0xd8] sm:$0xff] %vm2070, %v2033
  %2099 = vst.msk [vmem:[%s5 + $0xe0] sm:$0xff] %vm2070, %v2034
  %2100 = vst.msk [vmem:[%s5 + $0xe8] sm:$0xff] %vm2070, %v2035
  %2101 = vst.msk [vmem:[%s5 + $0xf0] sm:$0xff] %vm2070, %v2036
  %2102 = vst.msk [vmem:[%s5 + $0xf8] sm:$0xff] %vm2070, %v2037
  %2103 = vst.msk [vmem:[%s5 + $0x100] sm:$0xff] %vm2070, %v2038
  %2104 = vst.msk [vmem:[%s5 + $0x108] sm:$0xff] %vm2070, %v2039
  %2105 = vst.msk [vmem:[%s5 + $0x110] sm:$0xff] %vm2070, %v2040
  %2106 = vst.msk [vmem:[%s5 + $0x118] sm:$0xff] %vm2070, %v2041
  %2107 = vst.msk [vmem:[%s5 + $0x120] sm:$0xff] %vm2070, %v2042
  %2108 = vst.msk [vmem:[%s5 + $0x128] sm:$0xff] %vm2070, %v2043
  %2109 = vst.msk [vmem:[%s5 + $0x130] sm:$0xff] %vm2070, %v2044
  %2110 = vst.msk [vmem:[%s5 + $0x138] sm:$0xff] %vm2070, %v2045
  %2111 = vst.msk [vmem:[%s5 + $0x140] sm:$0xff] %vm2070, %v2046
  %2112 = vst.msk [vmem:[%s5 + $0x148] sm:$0xff] %vm2070, %v2047
  %2113 = vst.msk [vmem:[%s5 + $0x150] sm:$0xff] %vm2070, %v2048
  %2114 = vst.msk [vmem:[%s5 + $0x158] sm:$0xff] %vm2070, %v2049
  %2115 = vst.msk [vmem:[%s5 + $0x160] sm:$0xff] %vm2070, %v2050
  %2116 = vst.msk [vmem:[%s5 + $0x168] sm:$0xff] %vm2070, %v2051
  %2117 = vst.msk [vmem:[%s5 + $0x170] sm:$0xff] %vm2070, %v2052
  %2118 = vst.msk [vmem:[%s5 + $0x178] sm:$0xff] %vm2070, %v2053
  %2119 = vst.msk [vmem:[%s5 + $0x180] sm:$0xff] %vm2070, %v2054
  %2120 = vst.msk [vmem:[%s5 + $0x188] sm:$0xff] %vm2070, %v2055
  %2121 = vst.msk [vmem:[%s5 + $0x190] sm:$0xff] %vm2070, %v2056
  %2122 = vst.msk [vmem:[%s5 + $0x198] sm:$0xff] %vm2070, %v2057
  %2123 = vst.msk [vmem:[%s5 + $0x1a0] sm:$0xff] %vm2070, %v2058
  %2124 = vst.msk [vmem:[%s5 + $0x1a8] sm:$0xff] %vm2070, %v2059
  %2125 = vst.msk [vmem:[%s5 + $0x1b0] sm:$0xff] %vm2070, %v2060
  %2126 = vst.msk [vmem:[%s5 + $0x1b8] sm:$0xff] %vm2070, %v2061
  %2127 = vst.msk [vmem:[%s5 + $0x1c0] sm:$0xff] %vm2070, %v2062
  %2128 = vst.msk [vmem:[%s5 + $0x1c8] sm:$0xff] %vm2070, %v2063
  %2129 = vst.msk [vmem:[%s5 + $0x1d0] sm:$0xff] %vm2070, %v2064
  %2130 = vst.msk [vmem:[%s5 + $0x1d8] sm:$0xff] %vm2070, %v2065
  %2131 = vst.msk [vmem:[%s5 + $0x1e0] sm:$0xff] %vm2070, %v2066
  %2132 = vst.msk [vmem:[%s5 + $0x1e8] sm:$0xff] %vm2070, %v2067
  %2133 = vst.msk [vmem:[%s5 + $0x1f0] sm:$0xff] %vm2070, %v2068
  %2134 = vst.msk [vmem:[%s5 + $0x1f8] sm:$0xff] %vm2070, %v2069
  // Predicated region
  $region22: #{mlp_forward_padded.1} parent=0 // pred_check
    _
  $region23: #{mlp_forward_padded.1} parent=0 // pred_check_branch
    %2136 = sbr.rel (0) target = $region25
  $region24: #{mlp_forward_padded.1} parent=0 // pred_region
    _
  $region25: #{mlp_forward_padded.1} parent=0 // pred_fallthru
    _
  // Predicated region
  $region26: #{mlp_forward_padded.1} parent=0 // pred_check
    _
  $region27: #{mlp_forward_padded.1} parent=0 // pred_check_branch
    %2138 = sbr.rel (0) target = $region29
  $region28: #{mlp_forward_padded.1} parent=0 // pred_region
    _
  $region29: #{mlp_forward_padded.1} parent=0 // pred_fallthru
    _

</llo_original>
